<compile_context>
chip_gen: v6e
topology: v6e:2x2x1
jax: 0.10.0
libtpu: 0.0.40
codegen_flags: <defaults>
</compile_context>

<pallas_src>
import functools

import jax
import jax.numpy as jnp
from jax import lax
from jax.experimental import pallas as pl
from jax.experimental.pallas import tpu as pltpu


# ----------------------------------------------------------------------------
# Fused kernel: all LSTM layers + BatchNorm1d + Linear head.
# ----------------------------------------------------------------------------
def _lstm_model_kernel(num_layers, hidden_dim, seq_len, batch, *refs):
    L, H, T, B = num_layers, hidden_dim, seq_len, batch

    x_ref = refs[0]                                      # (T*B, Din) bf16
    layer_refs = [refs[1 + 3 * l: 4 + 3 * l] for l in range(L)]
    (gamma_ref, beta_ref, wfc_ref, bfc_ref,
     out_ref, xp_scr, seq_scr) = refs[1 + 3 * L:]

    # Lane mask for the "g" (cell-candidate) block; PyTorch gate order is
    # [i, f, g, o].  Hoisted out of all loops (JAX does not CSE broadcasts).
    lanes = lax.broadcasted_iota(jnp.int32, (B, 4 * H), 1)
    g_lane = (lanes >= 2 * H) & (lanes < 3 * H)

    h_last = jnp.zeros((B, H), jnp.float32)
    for layer in range(L):
        wih_ref, whh_ref, b_ref = layer_refs[layer]

        if layer == 0:
            x_seq = x_ref[...]                            # (T*B, Din) bf16
        else:
            x_seq = seq_scr[...]                          # (T*B, H)  bf16

        # Hoisted input projection (+ folded bias) for all timesteps at once:
        # one big MXU matmul instead of T tiny ones on the serial path.
        xp_scr[...] = (
            jnp.dot(x_seq, wih_ref[...], preferred_element_type=jnp.float32)
            + b_ref[...]
        )

        whh = whh_ref[...]                                # (H, 4H) bf16
        write_seq = layer < L - 1    # last layer only needs h_T for the head

        def step(t, carry):
            h, c = carry                                  # (B, H) f32 vregs
            # Only the recurrent matmul lives on the serial critical path.
            gates = xp_scr[pl.ds(t * B, B), :] + jnp.dot(
                h.astype(jnp.bfloat16), whh,
                preferred_element_type=jnp.float32)       # (B, 4H) f32
            # Single full-width tanh on the EUP; sigmoid(x)=0.5*(1+tanh(x/2)).
            th = jnp.tanh(jnp.where(g_lane, gates, 0.5 * gates))
            act = jnp.where(g_lane, th, 0.5 * (th + 1.0))
            i_g = act[:, 0 * H:1 * H]
            f_g = act[:, 1 * H:2 * H]
            g_g = act[:, 2 * H:3 * H]
            o_g = act[:, 3 * H:4 * H]
            c_new = f_g * c + i_g * g_g
            h_new = o_g * jnp.tanh(c_new)
            if write_seq:
                seq_scr[pl.ds(t * B, B), :] = h_new.astype(jnp.bfloat16)
            return h_new, c_new

        h0 = jnp.zeros((B, H), jnp.float32)
        c0 = jnp.zeros((B, H), jnp.float32)
        h_last, _ = lax.fori_loop(0, T, step, (h0, c0), unroll=True)

    # ---- head: BatchNorm1d (batch statistics) + Dropout(identity) + Linear ----
    mean = jnp.mean(h_last, axis=0, keepdims=True)
    var = jnp.mean((h_last - mean) ** 2, axis=0, keepdims=True)   # biased var
    h_bn = (h_last - mean) * lax.rsqrt(var + 1e-5)
    h_bn = h_bn * gamma_ref[...] + beta_ref[...]
    out_ref[...] = (
        jnp.dot(h_bn, wfc_ref[...], preferred_element_type=jnp.float32)
        + bfc_ref[...]
    ).astype(out_ref.dtype)


def _full_spec(shape):
    zeros = (0,) * len(shape)
    return pl.BlockSpec(shape, lambda: zeros)


# ----------------------------------------------------------------------------
# Full forward pass (PyTorch: x is batch_first (B, T, input_dim)).
# ----------------------------------------------------------------------------
@jax.jit
def lstm_model_forward(x_btd, params):
    lstm_layers = params["lstm"]
    num_layers = len(lstm_layers)
    B, T, Din = x_btd.shape
    H = params["bn"]["gamma"].shape[-1]
    O = params["fc"]["w_t"].shape[-1]

    # Time-major, flattened to (T*B, Din); bf16 to feed the MXU.
    x_flat = (jnp.transpose(x_btd, (1, 0, 2))
              .reshape(T * B, Din).astype(jnp.bfloat16))

    inputs = [x_flat]
    in_specs = [_full_spec(x_flat.shape)]
    for lp in lstm_layers:
        for arr in (lp["w_ih_t"], lp["w_hh_t"], lp["bias"]):
            inputs.append(arr)
            in_specs.append(_full_spec(arr.shape))
    for arr in (params["bn"]["gamma"], params["bn"]["beta"],
                params["fc"]["w_t"], params["fc"]["b"]):
        inputs.append(arr)
        in_specs.append(_full_spec(arr.shape))

    kernel = functools.partial(_lstm_model_kernel, num_layers, H, T, B)
    return pl.pallas_call(
        kernel,
        out_shape=jax.ShapeDtypeStruct((B, O), jnp.float32),
        in_specs=in_specs,
        out_specs=_full_spec((B, O)),
        scratch_shapes=[
            pltpu.VMEM((T * B, 4 * H), jnp.float32),  # hoisted input projection
            pltpu.VMEM((T * B, H), jnp.bfloat16),     # inter-layer hidden seq
        ],
        compiler_params=pltpu.CompilerParams(
            vmem_limit_bytes=32 * 1024 * 1024),
    )(*inputs)


# ----------------------------------------------------------------------------
# Parameter init (deterministic, matches PyTorch shapes / init ranges).
# ----------------------------------------------------------------------------
def init_params(key, input_dim, hidden_dim, output_dim, num_layers):
    params = {"lstm": []}
    k_lstm = 1.0 / jnp.sqrt(hidden_dim)
    for layer in range(num_layers):
        din = input_dim if layer == 0 else hidden_dim
        key, k1, k2, k3, k4 = jax.random.split(key, 5)
        w_ih = jax.random.uniform(k1, (4 * hidden_dim, din),
                                  minval=-k_lstm, maxval=k_lstm)
        w_hh = jax.random.uniform(k2, (4 * hidden_dim, hidden_dim),
                                  minval=-k_lstm, maxval=k_lstm)
        b_ih = jax.random.uniform(k3, (4 * hidden_dim,),
                                  minval=-k_lstm, maxval=k_lstm)
        b_hh = jax.random.uniform(k4, (4 * hidden_dim,),
                                  minval=-k_lstm, maxval=k_lstm)
        params["lstm"].append({
            # transposed once here so the kernel does plain (B, K) @ (K, 4H);
            # bf16 for the MXU, biases stay f32.
            "w_ih_t": w_ih.T.astype(jnp.bfloat16),          # (din, 4H)
            "w_hh_t": w_hh.T.astype(jnp.bfloat16),          # (H, 4H)
            "bias": (b_ih + b_hh).reshape(1, -1).astype(jnp.float32),
        })
    key, k5, k6 = jax.random.split(key, 3)
    k_fc = 1.0 / jnp.sqrt(hidden_dim)
    w_fc = jax.random.uniform(k5, (output_dim, hidden_dim),
                              minval=-k_fc, maxval=k_fc)
    b_fc = jax.random.uniform(k6, (output_dim,), minval=-k_fc, maxval=k_fc)
    params["fc"] = {
        "w_t": w_fc.T.astype(jnp.float32),                  # (H, O)
        "b": b_fc.reshape(1, -1).astype(jnp.float32),       # (1, O)
    }
    params["bn"] = {
        "gamma": jnp.ones((1, hidden_dim), jnp.float32),
        "beta": jnp.zeros((1, hidden_dim), jnp.float32),
    }
    return params


if __name__ == "__main__":
    batch, seq_len = 2, 8
    input_dim, hidden_dim, output_dim, num_layers = 16, 32, 4, 2
    dropout_rate = 0.1  # identity in the deterministic forward; kept for parity

    key = jax.random.PRNGKey(0)
    key, xk = jax.random.split(key)
    x = jax.random.normal(xk, (batch, seq_len, input_dim), dtype=jnp.float32)

    params = init_params(key, input_dim, hidden_dim, output_dim, num_layers)

    out = lstm_model_forward(x, params)
    jax.block_until_ready(out)
    assert out.shape == (batch, output_dim), out.shape
    print("KERNEL_OK")
</pallas_src>

<mosaic_0001>
module attributes {stable_mosaic.version = 11 : i64} {
  func.func @_lstm_model_kernel(%arg0: memref<16x16xbf16, #tpu.memory_space<vmem>>, %arg1: memref<16x128xbf16, #tpu.memory_space<vmem>>, %arg2: memref<32x128xbf16, #tpu.memory_space<vmem>>, %arg3: memref<1x128xf32, #tpu.memory_space<vmem>>, %arg4: memref<32x128xbf16, #tpu.memory_space<vmem>>, %arg5: memref<32x128xbf16, #tpu.memory_space<vmem>>, %arg6: memref<1x128xf32, #tpu.memory_space<vmem>>, %arg7: memref<1x32xf32, #tpu.memory_space<vmem>>, %arg8: memref<1x32xf32, #tpu.memory_space<vmem>>, %arg9: memref<32x4xf32, #tpu.memory_space<vmem>>, %arg10: memref<1x4xf32, #tpu.memory_space<vmem>>, %arg11: memref<2x4xf32, #tpu.memory_space<vmem>>, %arg12: memref<16x128xf32, #tpu.memory_space<vmem>>, %arg13: memref<16x32xbf16, #tpu.memory_space<vmem>>) attributes {dimension_semantics = [], scalar_prefetch = 0 : i64, scratch_operands = 2 : i64, tpu.core_type = #tpu.core_type<tc>} {
    %0 = tpu.iota {dimensions = array<i32: 1>} : vector<2x128xi32>
    %c64_i32 = arith.constant 64 : i32
    %1 = vector.broadcast %c64_i32 : i32 to vector<2x128xi32>
    %2 = arith.cmpi sge, %0, %1 : vector<2x128xi32>
    %c96_i32 = arith.constant 96 : i32
    %3 = vector.broadcast %c96_i32 : i32 to vector<2x128xi32>
    %4 = arith.cmpi slt, %0, %3 : vector<2x128xi32>
    %5 = arith.andi %2, %4 : vector<2x128xi1>
    %c0 = arith.constant 0 : index
    %c0_0 = arith.constant 0 : index
    %6 = vector.load %arg0[%c0, %c0_0] : memref<16x16xbf16, #tpu.memory_space<vmem>>, vector<16x16xbf16>
    %c0_1 = arith.constant 0 : index
    %c0_2 = arith.constant 0 : index
    %7 = vector.load %arg1[%c0_1, %c0_2] : memref<16x128xbf16, #tpu.memory_space<vmem>>, vector<16x128xbf16>
    %cst = arith.constant dense<0.000000e+00> : vector<16x128xf32>
    %8 = tpu.matmul %6, %7, %cst {dimension_numbers = #tpu.dot_dimension_numbers<[1], [0], [0], [1], [0, 0, 1, 1], [], []>} : vector<16x16xbf16>, vector<16x128xbf16>, vector<16x128xf32> -> vector<16x128xf32>
    %c0_3 = arith.constant 0 : index
    %c0_4 = arith.constant 0 : index
    %9 = vector.load %arg3[%c0_3, %c0_4] : memref<1x128xf32, #tpu.memory_space<vmem>>, vector<1x128xf32>
    %10 = vector.broadcast %9 : vector<1x128xf32> to vector<16x128xf32>
    %11 = arith.addf %8, %10 : vector<16x128xf32>
    %c0_5 = arith.constant 0 : index
    %c0_6 = arith.constant 0 : index
    %12 = vector.load %arg12[%c0_5, %c0_6] : memref<16x128xf32, #tpu.memory_space<vmem>>, vector<16x128xf32>
    tpu.vector_store %arg12[%c0_5, %c0_6], %11 {strides = array<i32>} : memref<16x128xf32, #tpu.memory_space<vmem>>, vector<16x128xf32>,
    %c0_7 = arith.constant 0 : index
    %c0_8 = arith.constant 0 : index
    %13 = vector.load %arg2[%c0_7, %c0_8] : memref<32x128xbf16, #tpu.memory_space<vmem>>, vector<32x128xbf16>
    %cst_9 = arith.constant 0.000000e+00 : f32
    %14 = vector.broadcast %cst_9 : f32 to vector<2x32xf32>
    %cst_10 = arith.constant 0.000000e+00 : f32
    %15 = vector.broadcast %cst_10 : f32 to vector<2x32xf32>
    %c0_i32 = arith.constant 0 : i32
    %c2_i32 = arith.constant 2 : i32
    %16 = arith.muli %c0_i32, %c2_i32 : i32
    %17 = arith.index_cast %16 : i32 to index
    %c0_11 = arith.constant 0 : index
    %18 = vector.load %arg12[%17, %c0_11] : memref<16x128xf32, #tpu.memory_space<vmem>>, vector<2x128xf32>
    %19 = arith.truncf %14 : vector<2x32xf32> to vector<2x32xbf16>
    %cst_12 = arith.constant dense<0.000000e+00> : vector<2x128xf32>
    %20 = tpu.matmul %19, %13, %cst_12 {dimension_numbers = #tpu.dot_dimension_numbers<[1], [0], [0], [1], [0, 0, 1, 1], [], []>} : vector<2x32xbf16>, vector<32x128xbf16>, vector<2x128xf32> -> vector<2x128xf32>
    %21 = arith.addf %18, %20 : vector<2x128xf32>
    %cst_13 = arith.constant 5.000000e-01 : f32
    %22 = vector.broadcast %cst_13 : f32 to vector<2x128xf32>
    %23 = arith.mulf %22, %21 : vector<2x128xf32>
    %24 = arith.select %5, %21, %23 : vector<2x128xi1>, vector<2x128xf32>
    %25 = math.tanh %24 : vector<2x128xf32>
    %cst_14 = arith.constant 1.000000e+00 : f32
    %26 = vector.broadcast %cst_14 : f32 to vector<2x128xf32>
    %27 = arith.addf %25, %26 : vector<2x128xf32>
    %cst_15 = arith.constant 5.000000e-01 : f32
    %28 = vector.broadcast %cst_15 : f32 to vector<2x128xf32>
    %29 = arith.mulf %28, %27 : vector<2x128xf32>
    %30 = arith.select %5, %25, %29 : vector<2x128xi1>, vector<2x128xf32>
    %31 = vector.extract_strided_slice %30 {offsets = [0, 0], sizes = [2, 32], strides = [1, 1]} : vector<2x128xf32> to vector<2x32xf32>
    %32 = vector.extract_strided_slice %30 {offsets = [0, 32], sizes = [2, 32], strides = [1, 1]} : vector<2x128xf32> to vector<2x32xf32>
    %33 = vector.extract_strided_slice %30 {offsets = [0, 64], sizes = [2, 32], strides = [1, 1]} : vector<2x128xf32> to vector<2x32xf32>
    %34 = vector.extract_strided_slice %30 {offsets = [0, 96], sizes = [2, 32], strides = [1, 1]} : vector<2x128xf32> to vector<2x32xf32>
    %35 = arith.mulf %32, %15 : vector<2x32xf32>
    %36 = arith.mulf %31, %33 : vector<2x32xf32>
    %37 = arith.addf %35, %36 : vector<2x32xf32>
    %38 = math.tanh %37 : vector<2x32xf32>
    %39 = arith.mulf %34, %38 : vector<2x32xf32>
    %40 = arith.truncf %39 : vector<2x32xf32> to vector<2x32xbf16>
    %c2_i32_16 = arith.constant 2 : i32
    %41 = arith.muli %c0_i32, %c2_i32_16 : i32
    %42 = arith.index_cast %41 : i32 to index
    %c0_17 = arith.constant 0 : index
    %43 = vector.load %arg13[%42, %c0_17] : memref<16x32xbf16, #tpu.memory_space<vmem>>, vector<2x32xbf16>
    tpu.vector_store %arg13[%42, %c0_17], %40 {strides = array<i32>} : memref<16x32xbf16, #tpu.memory_space<vmem>>, vector<2x32xbf16>,
    %c1_i32 = arith.constant 1 : i32
    %c2_i32_18 = arith.constant 2 : i32
    %44 = arith.muli %c1_i32, %c2_i32_18 : i32
    %45 = arith.index_cast %44 : i32 to index
    %c0_19 = arith.constant 0 : index
    %46 = vector.load %arg12[%45, %c0_19] : memref<16x128xf32, #tpu.memory_space<vmem>>, vector<2x128xf32>
    %47 = arith.truncf %39 : vector<2x32xf32> to vector<2x32xbf16>
    %cst_20 = arith.constant dense<0.000000e+00> : vector<2x128xf32>
    %48 = tpu.matmul %47, %13, %cst_20 {dimension_numbers = #tpu.dot_dimension_numbers<[1], [0], [0], [1], [0, 0, 1, 1], [], []>} : vector<2x32xbf16>, vector<32x128xbf16>, vector<2x128xf32> -> vector<2x128xf32>
    %49 = arith.addf %46, %48 : vector<2x128xf32>
    %cst_21 = arith.constant 5.000000e-01 : f32
    %50 = vector.broadcast %cst_21 : f32 to vector<2x128xf32>
    %51 = arith.mulf %50, %49 : vector<2x128xf32>
    %52 = arith.select %5, %49, %51 : vector<2x128xi1>, vector<2x128xf32>
    %53 = math.tanh %52 : vector<2x128xf32>
    %cst_22 = arith.constant 1.000000e+00 : f32
    %54 = vector.broadcast %cst_22 : f32 to vector<2x128xf32>
    %55 = arith.addf %53, %54 : vector<2x128xf32>
    %cst_23 = arith.constant 5.000000e-01 : f32
    %56 = vector.broadcast %cst_23 : f32 to vector<2x128xf32>
    %57 = arith.mulf %56, %55 : vector<2x128xf32>
    %58 = arith.select %5, %53, %57 : vector<2x128xi1>, vector<2x128xf32>
    %59 = vector.extract_strided_slice %58 {offsets = [0, 0], sizes = [2, 32], strides = [1, 1]} : vector<2x128xf32> to vector<2x32xf32>
    %60 = vector.extract_strided_slice %58 {offsets = [0, 32], sizes = [2, 32], strides = [1, 1]} : vector<2x128xf32> to vector<2x32xf32>
    %61 = vector.extract_strided_slice %58 {offsets = [0, 64], sizes = [2, 32], strides = [1, 1]} : vector<2x128xf32> to vector<2x32xf32>
    %62 = vector.extract_strided_slice %58 {offsets = [0, 96], sizes = [2, 32], strides = [1, 1]} : vector<2x128xf32> to vector<2x32xf32>
    %63 = arith.mulf %60, %37 : vector<2x32xf32>
    %64 = arith.mulf %59, %61 : vector<2x32xf32>
    %65 = arith.addf %63, %64 : vector<2x32xf32>
    %66 = math.tanh %65 : vector<2x32xf32>
    %67 = arith.mulf %62, %66 : vector<2x32xf32>
    %68 = arith.truncf %67 : vector<2x32xf32> to vector<2x32xbf16>
    %c2_i32_24 = arith.constant 2 : i32
    %69 = arith.muli %c1_i32, %c2_i32_24 : i32
    %70 = arith.index_cast %69 : i32 to index
    %c0_25 = arith.constant 0 : index
    %71 = vector.load %arg13[%70, %c0_25] : memref<16x32xbf16, #tpu.memory_space<vmem>>, vector<2x32xbf16>
    tpu.vector_store %arg13[%70, %c0_25], %68 {strides = array<i32>} : memref<16x32xbf16, #tpu.memory_space<vmem>>, vector<2x32xbf16>,
    %c2_i32_26 = arith.constant 2 : i32
    %c2_i32_27 = arith.constant 2 : i32
    %72 = arith.muli %c2_i32_26, %c2_i32_27 : i32
    %73 = arith.index_cast %72 : i32 to index
    %c0_28 = arith.constant 0 : index
    %74 = vector.load %arg12[%73, %c0_28] : memref<16x128xf32, #tpu.memory_space<vmem>>, vector<2x128xf32>
    %75 = arith.truncf %67 : vector<2x32xf32> to vector<2x32xbf16>
    %cst_29 = arith.constant dense<0.000000e+00> : vector<2x128xf32>
    %76 = tpu.matmul %75, %13, %cst_29 {dimension_numbers = #tpu.dot_dimension_numbers<[1], [0], [0], [1], [0, 0, 1, 1], [], []>} : vector<2x32xbf16>, vector<32x128xbf16>, vector<2x128xf32> -> vector<2x128xf32>
    %77 = arith.addf %74, %76 : vector<2x128xf32>
    %cst_30 = arith.constant 5.000000e-01 : f32
    %78 = vector.broadcast %cst_30 : f32 to vector<2x128xf32>
    %79 = arith.mulf %78, %77 : vector<2x128xf32>
    %80 = arith.select %5, %77, %79 : vector<2x128xi1>, vector<2x128xf32>
    %81 = math.tanh %80 : vector<2x128xf32>
    %cst_31 = arith.constant 1.000000e+00 : f32
    %82 = vector.broadcast %cst_31 : f32 to vector<2x128xf32>
    %83 = arith.addf %81, %82 : vector<2x128xf32>
    %cst_32 = arith.constant 5.000000e-01 : f32
    %84 = vector.broadcast %cst_32 : f32 to vector<2x128xf32>
    %85 = arith.mulf %84, %83 : vector<2x128xf32>
    %86 = arith.select %5, %81, %85 : vector<2x128xi1>, vector<2x128xf32>
    %87 = vector.extract_strided_slice %86 {offsets = [0, 0], sizes = [2, 32], strides = [1, 1]} : vector<2x128xf32> to vector<2x32xf32>
    %88 = vector.extract_strided_slice %86 {offsets = [0, 32], sizes = [2, 32], strides = [1, 1]} : vector<2x128xf32> to vector<2x32xf32>
    %89 = vector.extract_strided_slice %86 {offsets = [0, 64], sizes = [2, 32], strides = [1, 1]} : vector<2x128xf32> to vector<2x32xf32>
    %90 = vector.extract_strided_slice %86 {offsets = [0, 96], sizes = [2, 32], strides = [1, 1]} : vector<2x128xf32> to vector<2x32xf32>
    %91 = arith.mulf %88, %65 : vector<2x32xf32>
    %92 = arith.mulf %87, %89 : vector<2x32xf32>
    %93 = arith.addf %91, %92 : vector<2x32xf32>
    %94 = math.tanh %93 : vector<2x32xf32>
    %95 = arith.mulf %90, %94 : vector<2x32xf32>
    %96 = arith.truncf %95 : vector<2x32xf32> to vector<2x32xbf16>
    %c2_i32_33 = arith.constant 2 : i32
    %97 = arith.muli %c2_i32_26, %c2_i32_33 : i32
    %98 = arith.index_cast %97 : i32 to index
    %c0_34 = arith.constant 0 : index
    %99 = vector.load %arg13[%98, %c0_34] : memref<16x32xbf16, #tpu.memory_space<vmem>>, vector<2x32xbf16>
    tpu.vector_store %arg13[%98, %c0_34], %96 {strides = array<i32>} : memref<16x32xbf16, #tpu.memory_space<vmem>>, vector<2x32xbf16>,
    %c3_i32 = arith.constant 3 : i32
    %c2_i32_35 = arith.constant 2 : i32
    %100 = arith.muli %c3_i32, %c2_i32_35 : i32
    %101 = arith.index_cast %100 : i32 to index
    %c0_36 = arith.constant 0 : index
    %102 = vector.load %arg12[%101, %c0_36] : memref<16x128xf32, #tpu.memory_space<vmem>>, vector<2x128xf32>
    %103 = arith.truncf %95 : vector<2x32xf32> to vector<2x32xbf16>
    %cst_37 = arith.constant dense<0.000000e+00> : vector<2x128xf32>
    %104 = tpu.matmul %103, %13, %cst_37 {dimension_numbers = #tpu.dot_dimension_numbers<[1], [0], [0], [1], [0, 0, 1, 1], [], []>} : vector<2x32xbf16>, vector<32x128xbf16>, vector<2x128xf32> -> vector<2x128xf32>
    %105 = arith.addf %102, %104 : vector<2x128xf32>
    %cst_38 = arith.constant 5.000000e-01 : f32
    %106 = vector.broadcast %cst_38 : f32 to vector<2x128xf32>
    %107 = arith.mulf %106, %105 : vector<2x128xf32>
    %108 = arith.select %5, %105, %107 : vector<2x128xi1>, vector<2x128xf32>
    %109 = math.tanh %108 : vector<2x128xf32>
    %cst_39 = arith.constant 1.000000e+00 : f32
    %110 = vector.broadcast %cst_39 : f32 to vector<2x128xf32>
    %111 = arith.addf %109, %110 : vector<2x128xf32>
    %cst_40 = arith.constant 5.000000e-01 : f32
    %112 = vector.broadcast %cst_40 : f32 to vector<2x128xf32>
    %113 = arith.mulf %112, %111 : vector<2x128xf32>
    %114 = arith.select %5, %109, %113 : vector<2x128xi1>, vector<2x128xf32>
    %115 = vector.extract_strided_slice %114 {offsets = [0, 0], sizes = [2, 32], strides = [1, 1]} : vector<2x128xf32> to vector<2x32xf32>
    %116 = vector.extract_strided_slice %114 {offsets = [0, 32], sizes = [2, 32], strides = [1, 1]} : vector<2x128xf32> to vector<2x32xf32>
    %117 = vector.extract_strided_slice %114 {offsets = [0, 64], sizes = [2, 32], strides = [1, 1]} : vector<2x128xf32> to vector<2x32xf32>
    %118 = vector.extract_strided_slice %114 {offsets = [0, 96], sizes = [2, 32], strides = [1, 1]} : vector<2x128xf32> to vector<2x32xf32>
    %119 = arith.mulf %116, %93 : vector<2x32xf32>
    %120 = arith.mulf %115, %117 : vector<2x32xf32>
    %121 = arith.addf %119, %120 : vector<2x32xf32>
    %122 = math.tanh %121 : vector<2x32xf32>
    %123 = arith.mulf %118, %122 : vector<2x32xf32>
    %124 = arith.truncf %123 : vector<2x32xf32> to vector<2x32xbf16>
    %c2_i32_41 = arith.constant 2 : i32
    %125 = arith.muli %c3_i32, %c2_i32_41 : i32
    %126 = arith.index_cast %125 : i32 to index
    %c0_42 = arith.constant 0 : index
    %127 = vector.load %arg13[%126, %c0_42] : memref<16x32xbf16, #tpu.memory_space<vmem>>, vector<2x32xbf16>
    tpu.vector_store %arg13[%126, %c0_42], %124 {strides = array<i32>} : memref<16x32xbf16, #tpu.memory_space<vmem>>, vector<2x32xbf16>,
    %c4_i32 = arith.constant 4 : i32
    %c2_i32_43 = arith.constant 2 : i32
    %128 = arith.muli %c4_i32, %c2_i32_43 : i32
    %129 = arith.index_cast %128 : i32 to index
    %c0_44 = arith.constant 0 : index
    %130 = vector.load %arg12[%129, %c0_44] : memref<16x128xf32, #tpu.memory_space<vmem>>, vector<2x128xf32>
    %131 = arith.truncf %123 : vector<2x32xf32> to vector<2x32xbf16>
    %cst_45 = arith.constant dense<0.000000e+00> : vector<2x128xf32>
    %132 = tpu.matmul %131, %13, %cst_45 {dimension_numbers = #tpu.dot_dimension_numbers<[1], [0], [0], [1], [0, 0, 1, 1], [], []>} : vector<2x32xbf16>, vector<32x128xbf16>, vector<2x128xf32> -> vector<2x128xf32>
    %133 = arith.addf %130, %132 : vector<2x128xf32>
    %cst_46 = arith.constant 5.000000e-01 : f32
    %134 = vector.broadcast %cst_46 : f32 to vector<2x128xf32>
    %135 = arith.mulf %134, %133 : vector<2x128xf32>
    %136 = arith.select %5, %133, %135 : vector<2x128xi1>, vector<2x128xf32>
    %137 = math.tanh %136 : vector<2x128xf32>
    %cst_47 = arith.constant 1.000000e+00 : f32
    %138 = vector.broadcast %cst_47 : f32 to vector<2x128xf32>
    %139 = arith.addf %137, %138 : vector<2x128xf32>
    %cst_48 = arith.constant 5.000000e-01 : f32
    %140 = vector.broadcast %cst_48 : f32 to vector<2x128xf32>
    %141 = arith.mulf %140, %139 : vector<2x128xf32>
    %142 = arith.select %5, %137, %141 : vector<2x128xi1>, vector<2x128xf32>
    %143 = vector.extract_strided_slice %142 {offsets = [0, 0], sizes = [2, 32], strides = [1, 1]} : vector<2x128xf32> to vector<2x32xf32>
    %144 = vector.extract_strided_slice %142 {offsets = [0, 32], sizes = [2, 32], strides = [1, 1]} : vector<2x128xf32> to vector<2x32xf32>
    %145 = vector.extract_strided_slice %142 {offsets = [0, 64], sizes = [2, 32], strides = [1, 1]} : vector<2x128xf32> to vector<2x32xf32>
    %146 = vector.extract_strided_slice %142 {offsets = [0, 96], sizes = [2, 32], strides = [1, 1]} : vector<2x128xf32> to vector<2x32xf32>
    %147 = arith.mulf %144, %121 : vector<2x32xf32>
    %148 = arith.mulf %143, %145 : vector<2x32xf32>
    %149 = arith.addf %147, %148 : vector<2x32xf32>
    %150 = math.tanh %149 : vector<2x32xf32>
    %151 = arith.mulf %146, %150 : vector<2x32xf32>
    %152 = arith.truncf %151 : vector<2x32xf32> to vector<2x32xbf16>
    %c2_i32_49 = arith.constant 2 : i32
    %153 = arith.muli %c4_i32, %c2_i32_49 : i32
    %154 = arith.index_cast %153 : i32 to index
    %c0_50 = arith.constant 0 : index
    %155 = vector.load %arg13[%154, %c0_50] : memref<16x32xbf16, #tpu.memory_space<vmem>>, vector<2x32xbf16>
    tpu.vector_store %arg13[%154, %c0_50], %152 {strides = array<i32>} : memref<16x32xbf16, #tpu.memory_space<vmem>>, vector<2x32xbf16>,
    %c5_i32 = arith.constant 5 : i32
    %c2_i32_51 = arith.constant 2 : i32
    %156 = arith.muli %c5_i32, %c2_i32_51 : i32
    %157 = arith.index_cast %156 : i32 to index
    %c0_52 = arith.constant 0 : index
    %158 = vector.load %arg12[%157, %c0_52] : memref<16x128xf32, #tpu.memory_space<vmem>>, vector<2x128xf32>
    %159 = arith.truncf %151 : vector<2x32xf32> to vector<2x32xbf16>
    %cst_53 = arith.constant dense<0.000000e+00> : vector<2x128xf32>
    %160 = tpu.matmul %159, %13, %cst_53 {dimension_numbers = #tpu.dot_dimension_numbers<[1], [0], [0], [1], [0, 0, 1, 1], [], []>} : vector<2x32xbf16>, vector<32x128xbf16>, vector<2x128xf32> -> vector<2x128xf32>
    %161 = arith.addf %158, %160 : vector<2x128xf32>
    %cst_54 = arith.constant 5.000000e-01 : f32
    %162 = vector.broadcast %cst_54 : f32 to vector<2x128xf32>
    %163 = arith.mulf %162, %161 : vector<2x128xf32>
    %164 = arith.select %5, %161, %163 : vector<2x128xi1>, vector<2x128xf32>
    %165 = math.tanh %164 : vector<2x128xf32>
    %cst_55 = arith.constant 1.000000e+00 : f32
    %166 = vector.broadcast %cst_55 : f32 to vector<2x128xf32>
    %167 = arith.addf %165, %166 : vector<2x128xf32>
    %cst_56 = arith.constant 5.000000e-01 : f32
    %168 = vector.broadcast %cst_56 : f32 to vector<2x128xf32>
    %169 = arith.mulf %168, %167 : vector<2x128xf32>
    %170 = arith.select %5, %165, %169 : vector<2x128xi1>, vector<2x128xf32>
    %171 = vector.extract_strided_slice %170 {offsets = [0, 0], sizes = [2, 32], strides = [1, 1]} : vector<2x128xf32> to vector<2x32xf32>
    %172 = vector.extract_strided_slice %170 {offsets = [0, 32], sizes = [2, 32], strides = [1, 1]} : vector<2x128xf32> to vector<2x32xf32>
    %173 = vector.extract_strided_slice %170 {offsets = [0, 64], sizes = [2, 32], strides = [1, 1]} : vector<2x128xf32> to vector<2x32xf32>
    %174 = vector.extract_strided_slice %170 {offsets = [0, 96], sizes = [2, 32], strides = [1, 1]} : vector<2x128xf32> to vector<2x32xf32>
    %175 = arith.mulf %172, %149 : vector<2x32xf32>
    %176 = arith.mulf %171, %173 : vector<2x32xf32>
    %177 = arith.addf %175, %176 : vector<2x32xf32>
    %178 = math.tanh %177 : vector<2x32xf32>
    %179 = arith.mulf %174, %178 : vector<2x32xf32>
    %180 = arith.truncf %179 : vector<2x32xf32> to vector<2x32xbf16>
    %c2_i32_57 = arith.constant 2 : i32
    %181 = arith.muli %c5_i32, %c2_i32_57 : i32
    %182 = arith.index_cast %181 : i32 to index
    %c0_58 = arith.constant 0 : index
    %183 = vector.load %arg13[%182, %c0_58] : memref<16x32xbf16, #tpu.memory_space<vmem>>, vector<2x32xbf16>
    tpu.vector_store %arg13[%182, %c0_58], %180 {strides = array<i32>} : memref<16x32xbf16, #tpu.memory_space<vmem>>, vector<2x32xbf16>,
    %c6_i32 = arith.constant 6 : i32
    %c2_i32_59 = arith.constant 2 : i32
    %184 = arith.muli %c6_i32, %c2_i32_59 : i32
    %185 = arith.index_cast %184 : i32 to index
    %c0_60 = arith.constant 0 : index
    %186 = vector.load %arg12[%185, %c0_60] : memref<16x128xf32, #tpu.memory_space<vmem>>, vector<2x128xf32>
    %187 = arith.truncf %179 : vector<2x32xf32> to vector<2x32xbf16>
    %cst_61 = arith.constant dense<0.000000e+00> : vector<2x128xf32>
    %188 = tpu.matmul %187, %13, %cst_61 {dimension_numbers = #tpu.dot_dimension_numbers<[1], [0], [0], [1], [0, 0, 1, 1], [], []>} : vector<2x32xbf16>, vector<32x128xbf16>, vector<2x128xf32> -> vector<2x128xf32>
    %189 = arith.addf %186, %188 : vector<2x128xf32>
    %cst_62 = arith.constant 5.000000e-01 : f32
    %190 = vector.broadcast %cst_62 : f32 to vector<2x128xf32>
    %191 = arith.mulf %190, %189 : vector<2x128xf32>
    %192 = arith.select %5, %189, %191 : vector<2x128xi1>, vector<2x128xf32>
    %193 = math.tanh %192 : vector<2x128xf32>
    %cst_63 = arith.constant 1.000000e+00 : f32
    %194 = vector.broadcast %cst_63 : f32 to vector<2x128xf32>
    %195 = arith.addf %193, %194 : vector<2x128xf32>
    %cst_64 = arith.constant 5.000000e-01 : f32
    %196 = vector.broadcast %cst_64 : f32 to vector<2x128xf32>
    %197 = arith.mulf %196, %195 : vector<2x128xf32>
    %198 = arith.select %5, %193, %197 : vector<2x128xi1>, vector<2x128xf32>
    %199 = vector.extract_strided_slice %198 {offsets = [0, 0], sizes = [2, 32], strides = [1, 1]} : vector<2x128xf32> to vector<2x32xf32>
    %200 = vector.extract_strided_slice %198 {offsets = [0, 32], sizes = [2, 32], strides = [1, 1]} : vector<2x128xf32> to vector<2x32xf32>
    %201 = vector.extract_strided_slice %198 {offsets = [0, 64], sizes = [2, 32], strides = [1, 1]} : vector<2x128xf32> to vector<2x32xf32>
    %202 = vector.extract_strided_slice %198 {offsets = [0, 96], sizes = [2, 32], strides = [1, 1]} : vector<2x128xf32> to vector<2x32xf32>
    %203 = arith.mulf %200, %177 : vector<2x32xf32>
    %204 = arith.mulf %199, %201 : vector<2x32xf32>
    %205 = arith.addf %203, %204 : vector<2x32xf32>
    %206 = math.tanh %205 : vector<2x32xf32>
    %207 = arith.mulf %202, %206 : vector<2x32xf32>
    %208 = arith.truncf %207 : vector<2x32xf32> to vector<2x32xbf16>
    %c2_i32_65 = arith.constant 2 : i32
    %209 = arith.muli %c6_i32, %c2_i32_65 : i32
    %210 = arith.index_cast %209 : i32 to index
    %c0_66 = arith.constant 0 : index
    %211 = vector.load %arg13[%210, %c0_66] : memref<16x32xbf16, #tpu.memory_space<vmem>>, vector<2x32xbf16>
    tpu.vector_store %arg13[%210, %c0_66], %208 {strides = array<i32>} : memref<16x32xbf16, #tpu.memory_space<vmem>>, vector<2x32xbf16>,
    %c7_i32 = arith.constant 7 : i32
    %c2_i32_67 = arith.constant 2 : i32
    %212 = arith.muli %c7_i32, %c2_i32_67 : i32
    %213 = arith.index_cast %212 : i32 to index
    %c0_68 = arith.constant 0 : index
    %214 = vector.load %arg12[%213, %c0_68] : memref<16x128xf32, #tpu.memory_space<vmem>>, vector<2x128xf32>
    %215 = arith.truncf %207 : vector<2x32xf32> to vector<2x32xbf16>
    %cst_69 = arith.constant dense<0.000000e+00> : vector<2x128xf32>
    %216 = tpu.matmul %215, %13, %cst_69 {dimension_numbers = #tpu.dot_dimension_numbers<[1], [0], [0], [1], [0, 0, 1, 1], [], []>} : vector<2x32xbf16>, vector<32x128xbf16>, vector<2x128xf32> -> vector<2x128xf32>
    %217 = arith.addf %214, %216 : vector<2x128xf32>
    %cst_70 = arith.constant 5.000000e-01 : f32
    %218 = vector.broadcast %cst_70 : f32 to vector<2x128xf32>
    %219 = arith.mulf %218, %217 : vector<2x128xf32>
    %220 = arith.select %5, %217, %219 : vector<2x128xi1>, vector<2x128xf32>
    %221 = math.tanh %220 : vector<2x128xf32>
    %cst_71 = arith.constant 1.000000e+00 : f32
    %222 = vector.broadcast %cst_71 : f32 to vector<2x128xf32>
    %223 = arith.addf %221, %222 : vector<2x128xf32>
    %cst_72 = arith.constant 5.000000e-01 : f32
    %224 = vector.broadcast %cst_72 : f32 to vector<2x128xf32>
    %225 = arith.mulf %224, %223 : vector<2x128xf32>
    %226 = arith.select %5, %221, %225 : vector<2x128xi1>, vector<2x128xf32>
    %227 = vector.extract_strided_slice %226 {offsets = [0, 0], sizes = [2, 32], strides = [1, 1]} : vector<2x128xf32> to vector<2x32xf32>
    %228 = vector.extract_strided_slice %226 {offsets = [0, 32], sizes = [2, 32], strides = [1, 1]} : vector<2x128xf32> to vector<2x32xf32>
    %229 = vector.extract_strided_slice %226 {offsets = [0, 64], sizes = [2, 32], strides = [1, 1]} : vector<2x128xf32> to vector<2x32xf32>
    %230 = vector.extract_strided_slice %226 {offsets = [0, 96], sizes = [2, 32], strides = [1, 1]} : vector<2x128xf32> to vector<2x32xf32>
    %231 = arith.mulf %228, %205 : vector<2x32xf32>
    %232 = arith.mulf %227, %229 : vector<2x32xf32>
    %233 = arith.addf %231, %232 : vector<2x32xf32>
    %234 = math.tanh %233 : vector<2x32xf32>
    %235 = arith.mulf %230, %234 : vector<2x32xf32>
    %236 = arith.truncf %235 : vector<2x32xf32> to vector<2x32xbf16>
    %c2_i32_73 = arith.constant 2 : i32
    %237 = arith.muli %c7_i32, %c2_i32_73 : i32
    %238 = arith.index_cast %237 : i32 to index
    %c0_74 = arith.constant 0 : index
    %239 = vector.load %arg13[%238, %c0_74] : memref<16x32xbf16, #tpu.memory_space<vmem>>, vector<2x32xbf16>
    tpu.vector_store %arg13[%238, %c0_74], %236 {strides = array<i32>} : memref<16x32xbf16, #tpu.memory_space<vmem>>, vector<2x32xbf16>,
    %c8_i32 = arith.constant 8 : i32
    %c0_75 = arith.constant 0 : index
    %c0_76 = arith.constant 0 : index
    %240 = vector.load %arg13[%c0_75, %c0_76] : memref<16x32xbf16, #tpu.memory_space<vmem>>, vector<16x32xbf16>
    %c0_77 = arith.constant 0 : index
    %c0_78 = arith.constant 0 : index
    %241 = vector.load %arg4[%c0_77, %c0_78] : memref<32x128xbf16, #tpu.memory_space<vmem>>, vector<32x128xbf16>
    %cst_79 = arith.constant dense<0.000000e+00> : vector<16x128xf32>
    %242 = tpu.matmul %240, %241, %cst_79 {dimension_numbers = #tpu.dot_dimension_numbers<[1], [0], [0], [1], [0, 0, 1, 1], [], []>} : vector<16x32xbf16>, vector<32x128xbf16>, vector<16x128xf32> -> vector<16x128xf32>
    %c0_80 = arith.constant 0 : index
    %c0_81 = arith.constant 0 : index
    %243 = vector.load %arg6[%c0_80, %c0_81] : memref<1x128xf32, #tpu.memory_space<vmem>>, vector<1x128xf32>
    %244 = vector.broadcast %243 : vector<1x128xf32> to vector<16x128xf32>
    %245 = arith.addf %242, %244 : vector<16x128xf32>
    %c0_82 = arith.constant 0 : index
    %c0_83 = arith.constant 0 : index
    %246 = vector.load %arg12[%c0_82, %c0_83] : memref<16x128xf32, #tpu.memory_space<vmem>>, vector<16x128xf32>
    tpu.vector_store %arg12[%c0_82, %c0_83], %245 {strides = array<i32>} : memref<16x128xf32, #tpu.memory_space<vmem>>, vector<16x128xf32>,
    %c0_84 = arith.constant 0 : index
    %c0_85 = arith.constant 0 : index
    %247 = vector.load %arg5[%c0_84, %c0_85] : memref<32x128xbf16, #tpu.memory_space<vmem>>, vector<32x128xbf16>
    %cst_86 = arith.constant 0.000000e+00 : f32
    %248 = vector.broadcast %cst_86 : f32 to vector<2x32xf32>
    %cst_87 = arith.constant 0.000000e+00 : f32
    %249 = vector.broadcast %cst_87 : f32 to vector<2x32xf32>
    %c0_i32_88 = arith.constant 0 : i32
    %c2_i32_89 = arith.constant 2 : i32
    %250 = arith.muli %c0_i32_88, %c2_i32_89 : i32
    %251 = arith.index_cast %250 : i32 to index
    %c0_90 = arith.constant 0 : index
    %252 = vector.load %arg12[%251, %c0_90] : memref<16x128xf32, #tpu.memory_space<vmem>>, vector<2x128xf32>
    %253 = arith.truncf %248 : vector<2x32xf32> to vector<2x32xbf16>
    %cst_91 = arith.constant dense<0.000000e+00> : vector<2x128xf32>
    %254 = tpu.matmul %253, %247, %cst_91 {dimension_numbers = #tpu.dot_dimension_numbers<[1], [0], [0], [1], [0, 0, 1, 1], [], []>} : vector<2x32xbf16>, vector<32x128xbf16>, vector<2x128xf32> -> vector<2x128xf32>
    %255 = arith.addf %252, %254 : vector<2x128xf32>
    %cst_92 = arith.constant 5.000000e-01 : f32
    %256 = vector.broadcast %cst_92 : f32 to vector<2x128xf32>
    %257 = arith.mulf %256, %255 : vector<2x128xf32>
    %258 = arith.select %5, %255, %257 : vector<2x128xi1>, vector<2x128xf32>
    %259 = math.tanh %258 : vector<2x128xf32>
    %cst_93 = arith.constant 1.000000e+00 : f32
    %260 = vector.broadcast %cst_93 : f32 to vector<2x128xf32>
    %261 = arith.addf %259, %260 : vector<2x128xf32>
    %cst_94 = arith.constant 5.000000e-01 : f32
    %262 = vector.broadcast %cst_94 : f32 to vector<2x128xf32>
    %263 = arith.mulf %262, %261 : vector<2x128xf32>
    %264 = arith.select %5, %259, %263 : vector<2x128xi1>, vector<2x128xf32>
    %265 = vector.extract_strided_slice %264 {offsets = [0, 0], sizes = [2, 32], strides = [1, 1]} : vector<2x128xf32> to vector<2x32xf32>
    %266 = vector.extract_strided_slice %264 {offsets = [0, 32], sizes = [2, 32], strides = [1, 1]} : vector<2x128xf32> to vector<2x32xf32>
    %267 = vector.extract_strided_slice %264 {offsets = [0, 64], sizes = [2, 32], strides = [1, 1]} : vector<2x128xf32> to vector<2x32xf32>
    %268 = vector.extract_strided_slice %264 {offsets = [0, 96], sizes = [2, 32], strides = [1, 1]} : vector<2x128xf32> to vector<2x32xf32>
    %269 = arith.mulf %266, %249 : vector<2x32xf32>
    %270 = arith.mulf %265, %267 : vector<2x32xf32>
    %271 = arith.addf %269, %270 : vector<2x32xf32>
    %272 = math.tanh %271 : vector<2x32xf32>
    %273 = arith.mulf %268, %272 : vector<2x32xf32>
    %c1_i32_95 = arith.constant 1 : i32
    %c2_i32_96 = arith.constant 2 : i32
    %274 = arith.muli %c1_i32_95, %c2_i32_96 : i32
    %275 = arith.index_cast %274 : i32 to index
    %c0_97 = arith.constant 0 : index
    %276 = vector.load %arg12[%275, %c0_97] : memref<16x128xf32, #tpu.memory_space<vmem>>, vector<2x128xf32>
    %277 = arith.truncf %273 : vector<2x32xf32> to vector<2x32xbf16>
    %cst_98 = arith.constant dense<0.000000e+00> : vector<2x128xf32>
    %278 = tpu.matmul %277, %247, %cst_98 {dimension_numbers = #tpu.dot_dimension_numbers<[1], [0], [0], [1], [0, 0, 1, 1], [], []>} : vector<2x32xbf16>, vector<32x128xbf16>, vector<2x128xf32> -> vector<2x128xf32>
    %279 = arith.addf %276, %278 : vector<2x128xf32>
    %cst_99 = arith.constant 5.000000e-01 : f32
    %280 = vector.broadcast %cst_99 : f32 to vector<2x128xf32>
    %281 = arith.mulf %280, %279 : vector<2x128xf32>
    %282 = arith.select %5, %279, %281 : vector<2x128xi1>, vector<2x128xf32>
    %283 = math.tanh %282 : vector<2x128xf32>
    %cst_100 = arith.constant 1.000000e+00 : f32
    %284 = vector.broadcast %cst_100 : f32 to vector<2x128xf32>
    %285 = arith.addf %283, %284 : vector<2x128xf32>
    %cst_101 = arith.constant 5.000000e-01 : f32
    %286 = vector.broadcast %cst_101 : f32 to vector<2x128xf32>
    %287 = arith.mulf %286, %285 : vector<2x128xf32>
    %288 = arith.select %5, %283, %287 : vector<2x128xi1>, vector<2x128xf32>
    %289 = vector.extract_strided_slice %288 {offsets = [0, 0], sizes = [2, 32], strides = [1, 1]} : vector<2x128xf32> to vector<2x32xf32>
    %290 = vector.extract_strided_slice %288 {offsets = [0, 32], sizes = [2, 32], strides = [1, 1]} : vector<2x128xf32> to vector<2x32xf32>
    %291 = vector.extract_strided_slice %288 {offsets = [0, 64], sizes = [2, 32], strides = [1, 1]} : vector<2x128xf32> to vector<2x32xf32>
    %292 = vector.extract_strided_slice %288 {offsets = [0, 96], sizes = [2, 32], strides = [1, 1]} : vector<2x128xf32> to vector<2x32xf32>
    %293 = arith.mulf %290, %271 : vector<2x32xf32>
    %294 = arith.mulf %289, %291 : vector<2x32xf32>
    %295 = arith.addf %293, %294 : vector<2x32xf32>
    %296 = math.tanh %295 : vector<2x32xf32>
    %297 = arith.mulf %292, %296 : vector<2x32xf32>
    %c2_i32_102 = arith.constant 2 : i32
    %c2_i32_103 = arith.constant 2 : i32
    %298 = arith.muli %c2_i32_102, %c2_i32_103 : i32
    %299 = arith.index_cast %298 : i32 to index
    %c0_104 = arith.constant 0 : index
    %300 = vector.load %arg12[%299, %c0_104] : memref<16x128xf32, #tpu.memory_space<vmem>>, vector<2x128xf32>
    %301 = arith.truncf %297 : vector<2x32xf32> to vector<2x32xbf16>
    %cst_105 = arith.constant dense<0.000000e+00> : vector<2x128xf32>
    %302 = tpu.matmul %301, %247, %cst_105 {dimension_numbers = #tpu.dot_dimension_numbers<[1], [0], [0], [1], [0, 0, 1, 1], [], []>} : vector<2x32xbf16>, vector<32x128xbf16>, vector<2x128xf32> -> vector<2x128xf32>
    %303 = arith.addf %300, %302 : vector<2x128xf32>
    %cst_106 = arith.constant 5.000000e-01 : f32
    %304 = vector.broadcast %cst_106 : f32 to vector<2x128xf32>
    %305 = arith.mulf %304, %303 : vector<2x128xf32>
    %306 = arith.select %5, %303, %305 : vector<2x128xi1>, vector<2x128xf32>
    %307 = math.tanh %306 : vector<2x128xf32>
    %cst_107 = arith.constant 1.000000e+00 : f32
    %308 = vector.broadcast %cst_107 : f32 to vector<2x128xf32>
    %309 = arith.addf %307, %308 : vector<2x128xf32>
    %cst_108 = arith.constant 5.000000e-01 : f32
    %310 = vector.broadcast %cst_108 : f32 to vector<2x128xf32>
    %311 = arith.mulf %310, %309 : vector<2x128xf32>
    %312 = arith.select %5, %307, %311 : vector<2x128xi1>, vector<2x128xf32>
    %313 = vector.extract_strided_slice %312 {offsets = [0, 0], sizes = [2, 32], strides = [1, 1]} : vector<2x128xf32> to vector<2x32xf32>
    %314 = vector.extract_strided_slice %312 {offsets = [0, 32], sizes = [2, 32], strides = [1, 1]} : vector<2x128xf32> to vector<2x32xf32>
    %315 = vector.extract_strided_slice %312 {offsets = [0, 64], sizes = [2, 32], strides = [1, 1]} : vector<2x128xf32> to vector<2x32xf32>
    %316 = vector.extract_strided_slice %312 {offsets = [0, 96], sizes = [2, 32], strides = [1, 1]} : vector<2x128xf32> to vector<2x32xf32>
    %317 = arith.mulf %314, %295 : vector<2x32xf32>
    %318 = arith.mulf %313, %315 : vector<2x32xf32>
    %319 = arith.addf %317, %318 : vector<2x32xf32>
    %320 = math.tanh %319 : vector<2x32xf32>
    %321 = arith.mulf %316, %320 : vector<2x32xf32>
    %c3_i32_109 = arith.constant 3 : i32
    %c2_i32_110 = arith.constant 2 : i32
    %322 = arith.muli %c3_i32_109, %c2_i32_110 : i32
    %323 = arith.index_cast %322 : i32 to index
    %c0_111 = arith.constant 0 : index
    %324 = vector.load %arg12[%323, %c0_111] : memref<16x128xf32, #tpu.memory_space<vmem>>, vector<2x128xf32>
    %325 = arith.truncf %321 : vector<2x32xf32> to vector<2x32xbf16>
    %cst_112 = arith.constant dense<0.000000e+00> : vector<2x128xf32>
    %326 = tpu.matmul %325, %247, %cst_112 {dimension_numbers = #tpu.dot_dimension_numbers<[1], [0], [0], [1], [0, 0, 1, 1], [], []>} : vector<2x32xbf16>, vector<32x128xbf16>, vector<2x128xf32> -> vector<2x128xf32>
    %327 = arith.addf %324, %326 : vector<2x128xf32>
    %cst_113 = arith.constant 5.000000e-01 : f32
    %328 = vector.broadcast %cst_113 : f32 to vector<2x128xf32>
    %329 = arith.mulf %328, %327 : vector<2x128xf32>
    %330 = arith.select %5, %327, %329 : vector<2x128xi1>, vector<2x128xf32>
    %331 = math.tanh %330 : vector<2x128xf32>
    %cst_114 = arith.constant 1.000000e+00 : f32
    %332 = vector.broadcast %cst_114 : f32 to vector<2x128xf32>
    %333 = arith.addf %331, %332 : vector<2x128xf32>
    %cst_115 = arith.constant 5.000000e-01 : f32
    %334 = vector.broadcast %cst_115 : f32 to vector<2x128xf32>
    %335 = arith.mulf %334, %333 : vector<2x128xf32>
    %336 = arith.select %5, %331, %335 : vector<2x128xi1>, vector<2x128xf32>
    %337 = vector.extract_strided_slice %336 {offsets = [0, 0], sizes = [2, 32], strides = [1, 1]} : vector<2x128xf32> to vector<2x32xf32>
    %338 = vector.extract_strided_slice %336 {offsets = [0, 32], sizes = [2, 32], strides = [1, 1]} : vector<2x128xf32> to vector<2x32xf32>
    %339 = vector.extract_strided_slice %336 {offsets = [0, 64], sizes = [2, 32], strides = [1, 1]} : vector<2x128xf32> to vector<2x32xf32>
    %340 = vector.extract_strided_slice %336 {offsets = [0, 96], sizes = [2, 32], strides = [1, 1]} : vector<2x128xf32> to vector<2x32xf32>
    %341 = arith.mulf %338, %319 : vector<2x32xf32>
    %342 = arith.mulf %337, %339 : vector<2x32xf32>
    %343 = arith.addf %341, %342 : vector<2x32xf32>
    %344 = math.tanh %343 : vector<2x32xf32>
    %345 = arith.mulf %340, %344 : vector<2x32xf32>
    %c4_i32_116 = arith.constant 4 : i32
    %c2_i32_117 = arith.constant 2 : i32
    %346 = arith.muli %c4_i32_116, %c2_i32_117 : i32
    %347 = arith.index_cast %346 : i32 to index
    %c0_118 = arith.constant 0 : index
    %348 = vector.load %arg12[%347, %c0_118] : memref<16x128xf32, #tpu.memory_space<vmem>>, vector<2x128xf32>
    %349 = arith.truncf %345 : vector<2x32xf32> to vector<2x32xbf16>
    %cst_119 = arith.constant dense<0.000000e+00> : vector<2x128xf32>
    %350 = tpu.matmul %349, %247, %cst_119 {dimension_numbers = #tpu.dot_dimension_numbers<[1], [0], [0], [1], [0, 0, 1, 1], [], []>} : vector<2x32xbf16>, vector<32x128xbf16>, vector<2x128xf32> -> vector<2x128xf32>
    %351 = arith.addf %348, %350 : vector<2x128xf32>
    %cst_120 = arith.constant 5.000000e-01 : f32
    %352 = vector.broadcast %cst_120 : f32 to vector<2x128xf32>
    %353 = arith.mulf %352, %351 : vector<2x128xf32>
    %354 = arith.select %5, %351, %353 : vector<2x128xi1>, vector<2x128xf32>
    %355 = math.tanh %354 : vector<2x128xf32>
    %cst_121 = arith.constant 1.000000e+00 : f32
    %356 = vector.broadcast %cst_121 : f32 to vector<2x128xf32>
    %357 = arith.addf %355, %356 : vector<2x128xf32>
    %cst_122 = arith.constant 5.000000e-01 : f32
    %358 = vector.broadcast %cst_122 : f32 to vector<2x128xf32>
    %359 = arith.mulf %358, %357 : vector<2x128xf32>
    %360 = arith.select %5, %355, %359 : vector<2x128xi1>, vector<2x128xf32>
    %361 = vector.extract_strided_slice %360 {offsets = [0, 0], sizes = [2, 32], strides = [1, 1]} : vector<2x128xf32> to vector<2x32xf32>
    %362 = vector.extract_strided_slice %360 {offsets = [0, 32], sizes = [2, 32], strides = [1, 1]} : vector<2x128xf32> to vector<2x32xf32>
    %363 = vector.extract_strided_slice %360 {offsets = [0, 64], sizes = [2, 32], strides = [1, 1]} : vector<2x128xf32> to vector<2x32xf32>
    %364 = vector.extract_strided_slice %360 {offsets = [0, 96], sizes = [2, 32], strides = [1, 1]} : vector<2x128xf32> to vector<2x32xf32>
    %365 = arith.mulf %362, %343 : vector<2x32xf32>
    %366 = arith.mulf %361, %363 : vector<2x32xf32>
    %367 = arith.addf %365, %366 : vector<2x32xf32>
    %368 = math.tanh %367 : vector<2x32xf32>
    %369 = arith.mulf %364, %368 : vector<2x32xf32>
    %c5_i32_123 = arith.constant 5 : i32
    %c2_i32_124 = arith.constant 2 : i32
    %370 = arith.muli %c5_i32_123, %c2_i32_124 : i32
    %371 = arith.index_cast %370 : i32 to index
    %c0_125 = arith.constant 0 : index
    %372 = vector.load %arg12[%371, %c0_125] : memref<16x128xf32, #tpu.memory_space<vmem>>, vector<2x128xf32>
    %373 = arith.truncf %369 : vector<2x32xf32> to vector<2x32xbf16>
    %cst_126 = arith.constant dense<0.000000e+00> : vector<2x128xf32>
    %374 = tpu.matmul %373, %247, %cst_126 {dimension_numbers = #tpu.dot_dimension_numbers<[1], [0], [0], [1], [0, 0, 1, 1], [], []>} : vector<2x32xbf16>, vector<32x128xbf16>, vector<2x128xf32> -> vector<2x128xf32>
    %375 = arith.addf %372, %374 : vector<2x128xf32>
    %cst_127 = arith.constant 5.000000e-01 : f32
    %376 = vector.broadcast %cst_127 : f32 to vector<2x128xf32>
    %377 = arith.mulf %376, %375 : vector<2x128xf32>
    %378 = arith.select %5, %375, %377 : vector<2x128xi1>, vector<2x128xf32>
    %379 = math.tanh %378 : vector<2x128xf32>
    %cst_128 = arith.constant 1.000000e+00 : f32
    %380 = vector.broadcast %cst_128 : f32 to vector<2x128xf32>
    %381 = arith.addf %379, %380 : vector<2x128xf32>
    %cst_129 = arith.constant 5.000000e-01 : f32
    %382 = vector.broadcast %cst_129 : f32 to vector<2x128xf32>
    %383 = arith.mulf %382, %381 : vector<2x128xf32>
    %384 = arith.select %5, %379, %383 : vector<2x128xi1>, vector<2x128xf32>
    %385 = vector.extract_strided_slice %384 {offsets = [0, 0], sizes = [2, 32], strides = [1, 1]} : vector<2x128xf32> to vector<2x32xf32>
    %386 = vector.extract_strided_slice %384 {offsets = [0, 32], sizes = [2, 32], strides = [1, 1]} : vector<2x128xf32> to vector<2x32xf32>
    %387 = vector.extract_strided_slice %384 {offsets = [0, 64], sizes = [2, 32], strides = [1, 1]} : vector<2x128xf32> to vector<2x32xf32>
    %388 = vector.extract_strided_slice %384 {offsets = [0, 96], sizes = [2, 32], strides = [1, 1]} : vector<2x128xf32> to vector<2x32xf32>
    %389 = arith.mulf %386, %367 : vector<2x32xf32>
    %390 = arith.mulf %385, %387 : vector<2x32xf32>
    %391 = arith.addf %389, %390 : vector<2x32xf32>
    %392 = math.tanh %391 : vector<2x32xf32>
    %393 = arith.mulf %388, %392 : vector<2x32xf32>
    %c6_i32_130 = arith.constant 6 : i32
    %c2_i32_131 = arith.constant 2 : i32
    %394 = arith.muli %c6_i32_130, %c2_i32_131 : i32
    %395 = arith.index_cast %394 : i32 to index
    %c0_132 = arith.constant 0 : index
    %396 = vector.load %arg12[%395, %c0_132] : memref<16x128xf32, #tpu.memory_space<vmem>>, vector<2x128xf32>
    %397 = arith.truncf %393 : vector<2x32xf32> to vector<2x32xbf16>
    %cst_133 = arith.constant dense<0.000000e+00> : vector<2x128xf32>
    %398 = tpu.matmul %397, %247, %cst_133 {dimension_numbers = #tpu.dot_dimension_numbers<[1], [0], [0], [1], [0, 0, 1, 1], [], []>} : vector<2x32xbf16>, vector<32x128xbf16>, vector<2x128xf32> -> vector<2x128xf32>
    %399 = arith.addf %396, %398 : vector<2x128xf32>
    %cst_134 = arith.constant 5.000000e-01 : f32
    %400 = vector.broadcast %cst_134 : f32 to vector<2x128xf32>
    %401 = arith.mulf %400, %399 : vector<2x128xf32>
    %402 = arith.select %5, %399, %401 : vector<2x128xi1>, vector<2x128xf32>
    %403 = math.tanh %402 : vector<2x128xf32>
    %cst_135 = arith.constant 1.000000e+00 : f32
    %404 = vector.broadcast %cst_135 : f32 to vector<2x128xf32>
    %405 = arith.addf %403, %404 : vector<2x128xf32>
    %cst_136 = arith.constant 5.000000e-01 : f32
    %406 = vector.broadcast %cst_136 : f32 to vector<2x128xf32>
    %407 = arith.mulf %406, %405 : vector<2x128xf32>
    %408 = arith.select %5, %403, %407 : vector<2x128xi1>, vector<2x128xf32>
    %409 = vector.extract_strided_slice %408 {offsets = [0, 0], sizes = [2, 32], strides = [1, 1]} : vector<2x128xf32> to vector<2x32xf32>
    %410 = vector.extract_strided_slice %408 {offsets = [0, 32], sizes = [2, 32], strides = [1, 1]} : vector<2x128xf32> to vector<2x32xf32>
    %411 = vector.extract_strided_slice %408 {offsets = [0, 64], sizes = [2, 32], strides = [1, 1]} : vector<2x128xf32> to vector<2x32xf32>
    %412 = vector.extract_strided_slice %408 {offsets = [0, 96], sizes = [2, 32], strides = [1, 1]} : vector<2x128xf32> to vector<2x32xf32>
    %413 = arith.mulf %410, %391 : vector<2x32xf32>
    %414 = arith.mulf %409, %411 : vector<2x32xf32>
    %415 = arith.addf %413, %414 : vector<2x32xf32>
    %416 = math.tanh %415 : vector<2x32xf32>
    %417 = arith.mulf %412, %416 : vector<2x32xf32>
    %c7_i32_137 = arith.constant 7 : i32
    %c2_i32_138 = arith.constant 2 : i32
    %418 = arith.muli %c7_i32_137, %c2_i32_138 : i32
    %419 = arith.index_cast %418 : i32 to index
    %c0_139 = arith.constant 0 : index
    %420 = vector.load %arg12[%419, %c0_139] : memref<16x128xf32, #tpu.memory_space<vmem>>, vector<2x128xf32>
    %421 = arith.truncf %417 : vector<2x32xf32> to vector<2x32xbf16>
    %cst_140 = arith.constant dense<0.000000e+00> : vector<2x128xf32>
    %422 = tpu.matmul %421, %247, %cst_140 {dimension_numbers = #tpu.dot_dimension_numbers<[1], [0], [0], [1], [0, 0, 1, 1], [], []>} : vector<2x32xbf16>, vector<32x128xbf16>, vector<2x128xf32> -> vector<2x128xf32>
    %423 = arith.addf %420, %422 : vector<2x128xf32>
    %cst_141 = arith.constant 5.000000e-01 : f32
    %424 = vector.broadcast %cst_141 : f32 to vector<2x128xf32>
    %425 = arith.mulf %424, %423 : vector<2x128xf32>
    %426 = arith.select %5, %423, %425 : vector<2x128xi1>, vector<2x128xf32>
    %427 = math.tanh %426 : vector<2x128xf32>
    %cst_142 = arith.constant 1.000000e+00 : f32
    %428 = vector.broadcast %cst_142 : f32 to vector<2x128xf32>
    %429 = arith.addf %427, %428 : vector<2x128xf32>
    %cst_143 = arith.constant 5.000000e-01 : f32
    %430 = vector.broadcast %cst_143 : f32 to vector<2x128xf32>
    %431 = arith.mulf %430, %429 : vector<2x128xf32>
    %432 = arith.select %5, %427, %431 : vector<2x128xi1>, vector<2x128xf32>
    %433 = vector.extract_strided_slice %432 {offsets = [0, 0], sizes = [2, 32], strides = [1, 1]} : vector<2x128xf32> to vector<2x32xf32>
    %434 = vector.extract_strided_slice %432 {offsets = [0, 32], sizes = [2, 32], strides = [1, 1]} : vector<2x128xf32> to vector<2x32xf32>
    %435 = vector.extract_strided_slice %432 {offsets = [0, 64], sizes = [2, 32], strides = [1, 1]} : vector<2x128xf32> to vector<2x32xf32>
    %436 = vector.extract_strided_slice %432 {offsets = [0, 96], sizes = [2, 32], strides = [1, 1]} : vector<2x128xf32> to vector<2x32xf32>
    %437 = arith.mulf %434, %415 : vector<2x32xf32>
    %438 = arith.mulf %433, %435 : vector<2x32xf32>
    %439 = arith.addf %437, %438 : vector<2x32xf32>
    %440 = math.tanh %439 : vector<2x32xf32>
    %441 = arith.mulf %436, %440 : vector<2x32xf32>
    %c8_i32_144 = arith.constant 8 : i32
    %cst_145 = arith.constant dense<0.000000e+00> : vector<32xf32>
    %442 = vector.multi_reduction <add>, %441, %cst_145 [0] : vector<2x32xf32> to vector<32xf32>
    %443 = vector.shape_cast %442 : vector<32xf32> to vector<1x32xf32>
    %cst_146 = arith.constant 2.000000e+00 : f32
    %444 = vector.broadcast %cst_146 : f32 to vector<1x32xf32>
    %445 = arith.divf %443, %444 : vector<1x32xf32>
    %446 = vector.broadcast %445 : vector<1x32xf32> to vector<2x32xf32>
    %447 = arith.subf %441, %446 : vector<2x32xf32>
    %448 = arith.mulf %447, %447 : vector<2x32xf32>
    %cst_147 = arith.constant dense<0.000000e+00> : vector<32xf32>
    %449 = vector.multi_reduction <add>, %448, %cst_147 [0] : vector<2x32xf32> to vector<32xf32>
    %450 = vector.shape_cast %449 : vector<32xf32> to vector<1x32xf32>
    %cst_148 = arith.constant 2.000000e+00 : f32
    %451 = vector.broadcast %cst_148 : f32 to vector<1x32xf32>
    %452 = arith.divf %450, %451 : vector<1x32xf32>
    %453 = vector.broadcast %445 : vector<1x32xf32> to vector<2x32xf32>
    %454 = arith.subf %441, %453 : vector<2x32xf32>
    %cst_149 = arith.constant 9.99999974E-6 : f32
    %455 = vector.broadcast %cst_149 : f32 to vector<1x32xf32>
    %456 = arith.addf %452, %455 : vector<1x32xf32>
    %457 = math.rsqrt %456 : vector<1x32xf32>
    %458 = vector.broadcast %457 : vector<1x32xf32> to vector<2x32xf32>
    %459 = arith.mulf %454, %458 : vector<2x32xf32>
    %c0_150 = arith.constant 0 : index
    %c0_151 = arith.constant 0 : index
    %460 = vector.load %arg7[%c0_150, %c0_151] : memref<1x32xf32, #tpu.memory_space<vmem>>, vector<1x32xf32>
    %461 = vector.broadcast %460 : vector<1x32xf32> to vector<2x32xf32>
    %462 = arith.mulf %459, %461 : vector<2x32xf32>
    %c0_152 = arith.constant 0 : index
    %c0_153 = arith.constant 0 : index
    %463 = vector.load %arg8[%c0_152, %c0_153] : memref<1x32xf32, #tpu.memory_space<vmem>>, vector<1x32xf32>
    %464 = vector.broadcast %463 : vector<1x32xf32> to vector<2x32xf32>
    %465 = arith.addf %462, %464 : vector<2x32xf32>
    %c0_154 = arith.constant 0 : index
    %c0_155 = arith.constant 0 : index
    %466 = vector.load %arg9[%c0_154, %c0_155] : memref<32x4xf32, #tpu.memory_space<vmem>>, vector<32x4xf32>
    %cst_156 = arith.constant dense<0.000000e+00> : vector<2x4xf32>
    %467 = tpu.matmul %465, %466, %cst_156 {dimension_numbers = #tpu.dot_dimension_numbers<[1], [0], [0], [1], [0, 0, 1, 1], [], []>} : vector<2x32xf32>, vector<32x4xf32>, vector<2x4xf32> -> vector<2x4xf32>
    %c0_157 = arith.constant 0 : index
    %c0_158 = arith.constant 0 : index
    %468 = vector.load %arg10[%c0_157, %c0_158] : memref<1x4xf32, #tpu.memory_space<vmem>>, vector<1x4xf32>
    %469 = vector.broadcast %468 : vector<1x4xf32> to vector<2x4xf32>
    %470 = arith.addf %467, %469 : vector<2x4xf32>
    %c0_159 = arith.constant 0 : index
    %c0_160 = arith.constant 0 : index
    %471 = vector.load %arg11[%c0_159, %c0_160] : memref<2x4xf32, #tpu.memory_space<vmem>>, vector<2x4xf32>
    tpu.vector_store %arg11[%c0_159, %c0_160], %470 {strides = array<i32>} : memref<2x4xf32, #tpu.memory_space<vmem>>, vector<2x4xf32>,
    return
  }
}

</mosaic_0001>

<llo_original>
// kernel: lstm_model_forward.1
$region0: #{lstm_model_forward.1}
  #allocation0 [shape = 'u32[]', space=smem, size = 0x4, offset = 0x4, fixed_abs, tag = 'smem constant byte address 0x4 - core index']
  #allocation1 [shape = 'u32[144,128]{1,0:T(1,128)}', space=vmem, size = 0x12000, scoped, tag = 'internal scratch']
  #allocation2 [shape = 'f32[16,128]{1,0:T(8,128)}', space=vmem, size = 0x2000, scoped, tag = 'scratch operand']
  #allocation3 [shape = 'bf16[16,32]{1,0:T(8,128)(2,1)}', space=vmem, size = 0x1000, scoped, tag = 'scratch operand']
  %s0 = inlined_call_operand.vmem [shape: bf16[16,16], index: 0, kind: input, shape index: {}]
  %s1 = inlined_call_operand.vmem [shape: bf16[16,128], index: 1, kind: input, shape index: {}]
  %s2 = inlined_call_operand.vmem [shape: bf16[32,128], index: 2, kind: input, shape index: {}]
  %s3 = inlined_call_operand.vmem [shape: f32[1,128], index: 3, kind: input, shape index: {}]
  %s4 = inlined_call_operand.vmem [shape: bf16[32,128], index: 4, kind: input, shape index: {}]
  %s5 = inlined_call_operand.vmem [shape: bf16[32,128], index: 5, kind: input, shape index: {}]
  %s6 = inlined_call_operand.vmem [shape: f32[1,128], index: 6, kind: input, shape index: {}]
  %s7 = inlined_call_operand.vmem [shape: f32[1,32], index: 7, kind: input, shape index: {}]
  %s8 = inlined_call_operand.vmem [shape: f32[1,32], index: 8, kind: input, shape index: {}]
  %s9 = inlined_call_operand.vmem [shape: f32[32,4], index: 9, kind: input, shape index: {}]
  %s10 = inlined_call_operand.vmem [shape: f32[1,4], index: 10, kind: input, shape index: {}]
  %s11 = inlined_call_operand.hbm [shape: f32[2,4], index: 11, kind: output, shape index: {}]
  %s12 = sld [smem:[#allocation0]]
  $region54: #{lstm_model_forward.1} parent=0
    _
  %s14 = ssub.s32 1, %s12
  %s15 = scalar_select 0, %s14, %s12
  $region1: #{lstm_model_forward.1} parent=0
    #allocation4 [shape = 'u8[1024]{0}', space=vmem, size = 0x400, scoped, tag = 'output window, operand 0, single buffered']
    #allocation5 [shape = 's32[1]{0}', space=sflag, size = 0x4, scoped, tag = 'scoped memory for lstm_model_forward.1']
    %16 = vsyncpa [#allocation5], 0
    // Predicated region
    $region2: #{lstm_model_forward.1} parent=1 // pred_check
      _
    $region3: #{lstm_model_forward.1} parent=1 // pred_check_branch
      %18 = sbr.rel (0) target = $region5
    $region4: #{lstm_model_forward.1} parent=1 // pred_region
      _
    $region5: #{lstm_model_forward.1} parent=1 // pred_fallthru
      _
    // Predicated region
    $region6: #{lstm_model_forward.1} parent=1 // pred_check
      _
    $region7: #{lstm_model_forward.1} parent=1 // pred_check_branch
      %20 = sbr.rel (0) target = $region9
    $region8: #{lstm_model_forward.1} parent=1 // pred_region
      _
    $region9: #{lstm_model_forward.1} parent=1 // pred_fallthru
      _
    // Predicated region
    $region10: #{lstm_model_forward.1} parent=1 // pred_check
      _
    $region11: #{lstm_model_forward.1} parent=1 // pred_check_branch
      %22 = sbr.rel (0) target = $region13
    $region12: #{lstm_model_forward.1} parent=1 // pred_region
      _
    $region13: #{lstm_model_forward.1} parent=1 // pred_fallthru
      _
    // Predicated region
    $region14: #{lstm_model_forward.1} parent=1 // pred_check
      _
    $region15: #{lstm_model_forward.1} parent=1 // pred_check_branch
      %24 = sbr.rel (0) target = $region17
    $region16: #{lstm_model_forward.1} parent=1 // pred_region
      _
    $region17: #{lstm_model_forward.1} parent=1 // pred_fallthru
      _
    // Predicated region
    $region18: #{lstm_model_forward.1} parent=1 // pred_check
      _
    $region19: #{lstm_model_forward.1} parent=1 // pred_check_branch
      %26 = sbr.rel (0) target = $region21
    $region20: #{lstm_model_forward.1} parent=1 // pred_region
      _
    $region21: #{lstm_model_forward.1} parent=1 // pred_fallthru
      _
    // Predicated region
    $region22: #{lstm_model_forward.1} parent=1 // pred_check
      _
    $region23: #{lstm_model_forward.1} parent=1 // pred_check_branch
      %28 = sbr.rel (0) target = $region25
    $region24: #{lstm_model_forward.1} parent=1 // pred_region
      _
    $region25: #{lstm_model_forward.1} parent=1 // pred_fallthru
      _
    // Predicated region
    $region26: #{lstm_model_forward.1} parent=1 // pred_check
      _
    $region27: #{lstm_model_forward.1} parent=1 // pred_check_branch
      %30 = sbr.rel (0) target = $region29
    $region28: #{lstm_model_forward.1} parent=1 // pred_region
      _
    $region29: #{lstm_model_forward.1} parent=1 // pred_fallthru
      _
    // Predicated region
    $region30: #{lstm_model_forward.1} parent=1 // pred_check
      _
    $region31: #{lstm_model_forward.1} parent=1 // pred_check_branch
      %32 = sbr.rel (0) target = $region33
    $region32: #{lstm_model_forward.1} parent=1 // pred_region
      _
    $region33: #{lstm_model_forward.1} parent=1 // pred_fallthru
      _
    // Predicated region
    $region34: #{lstm_model_forward.1} parent=1 // pred_check
      _
    $region35: #{lstm_model_forward.1} parent=1 // pred_check_branch
      %34 = sbr.rel (0) target = $region37
    $region36: #{lstm_model_forward.1} parent=1 // pred_region
      _
    $region37: #{lstm_model_forward.1} parent=1 // pred_fallthru
      _
    // Predicated region
    $region38: #{lstm_model_forward.1} parent=1 // pred_check
      _
    $region39: #{lstm_model_forward.1} parent=1 // pred_check_branch
      %36 = sbr.rel (0) target = $region41
    $region40: #{lstm_model_forward.1} parent=1 // pred_region
      _
    $region41: #{lstm_model_forward.1} parent=1 // pred_fallthru
      _
    // Predicated region
    $region42: #{lstm_model_forward.1} parent=1 // pred_check
      _
    $region43: #{lstm_model_forward.1} parent=1 // pred_check_branch
      %38 = sbr.rel (0) target = $region45
    $region44: #{lstm_model_forward.1} parent=1 // pred_region
      _
    $region45: #{lstm_model_forward.1} parent=1 // pred_fallthru
      _
    %v40 = vlaneseq
    %v41 = vand.u32 %v40, 127
    %vm42 = vcmp.ge.s32.totalorder %v41, 64
    %vm43 = vcmp.lt.s32.totalorder %v41, 96
    %vm44 = vmand %vm42, %vm43
    %v45 = vld [vmem:[%s0] sm:$0xf]
    %v46 = vld [vmem:[%s0 + $0x4] sm:$0xf]
    %v47 = vld [vmem:[%s1] sm:$0xf]
    %v48 = vld [vmem:[%s1 + $0x4] sm:$0xf]
    %v49 = vld [vmem:[%s3] sm:$0x1]
    %v51 = vlaneseq
    %v52 = vshrl.u32 %v51, 7
    %v53 = vsub.s32 0, %v52
    %v54 = vrot.slane %v49, %v53
    %v58 = vunpack.c.l.b16 %v45
    %v59 = vunpack.c.l.b16 %v46
    %v60 = vpack.c.b16 %v59, %v58
    %v63 = vunpack.c.l.b16 %v47
    %v64 = vunpack.c.l.b16 %v48
    %v65 = vpack.c.b16 %v64, %v63
    %vm67 = vcmask 130048
    %v69 = vsel %vm67, %v60, 0
    %71 = vmatprep.subr.bf16.mxu0 0
    %72 = vmatpush1.bf16.msra.mxu0 0
    %73 = vmatprep.subr.bf16.mxu0 0
    %74 = vmatpush1.bf16.msra.mxu0 0
    %75 = vmatprep.subr.bf16.mxu0 0
    %76 = vmatpush1.bf16.msra.mxu0 0
    %77 = vmatprep.subr.bf16.mxu0 0
    %78 = vmatpush1.bf16.msra.mxu0 0
    %79 = vmatprep.subr.bf16.mxu0 0
    %80 = vmatpush1.bf16.msra.mxu0 0
    %81 = vmatprep.subr.bf16.mxu0 0
    %82 = vmatpush1.bf16.msra.mxu0 0
    %83 = vmatprep.subr.bf16.mxu0 0
    %84 = vmatpush1.bf16.msra.mxu0 0
    %85 = vmatprep.subr.bf16.mxu0 0
    %86 = vmatpush1.bf16.msra.mxu0 %v65
    %87 = vmatprep.subr.bf16.mxu0 0
    %88 = vmatpush2.bf16.msra.mxu0 0
    %89 = vmatprep.subr.bf16.mxu0 0
    %90 = vmatpush2.bf16.msra.mxu0 0
    %91 = vmatprep.subr.bf16.mxu0 0
    %92 = vmatpush2.bf16.msra.mxu0 0
    %93 = vmatprep.subr.bf16.mxu0 0
    %94 = vmatpush2.bf16.msra.mxu0 0
    %95 = vmatprep.subr.bf16.mxu0 0
    %96 = vmatpush2.bf16.msra.mxu0 0
    %97 = vmatprep.subr.bf16.mxu0 0
    %98 = vmatpush2.bf16.msra.mxu0 0
    %99 = vmatprep.subr.bf16.mxu0 0
    %100 = vmatpush2.bf16.msra.mxu0 0
    %101 = vmatprep.subr.bf16.mxu0 0
    %102 = vmatpush2.bf16.msra.mxu0 0
    %103 = vmatprep.mubr.bf16.mxu0 0
    %104 = vmatmul.mubr.bf16.gmra.mxu0 %v69
    %v105 = vpop.f32.mrf.mxu0
    %v106 = vadd.f32 %v54, %v105
    %v107 = vpop.f32.mrf.mxu0
    %v108 = vpop.f32.mrf.mxu0
    %v109 = vadd.f32 %v54, %v108
    %v110 = vpop.f32.mrf.mxu0
    %111 = vdwg.mxu0
    %112 = vst [vmem:[#allocation2] sm:$0xff] %v106
    %113 = vst [vmem:[#allocation2 + $0x8] sm:$0xff] %v109
    %v114 = vld [vmem:[%s2] sm:$0xf]
    %v115 = vld [vmem:[%s2 + $0x4] sm:$0xf]
    %v116 = vld [vmem:[%s2 + $0x8] sm:$0xf]
    %v117 = vld [vmem:[%s2 + $0xc] sm:$0xf]
    %v118 = vld [vmem:[#allocation2] sm:$0x3]
    %v123 = vunpack.c.l.b16 %v114
    %v124 = vunpack.c.l.b16 %v115
    %v125 = vunpack.c.l.b16 %v116
    %v126 = vunpack.c.l.b16 %v117
    %v127 = vpack.c.b16 %v124, %v123
    %v128 = vpack.c.b16 %v126, %v125
    %vm131 = vcmask 261120
    %v133 = vsel %vm131, 0, 0
    %135 = vmatprep.subr.bf16.mxu0 0
    %136 = vmatpush1.bf16.msra.mxu0 0
    %137 = vmatprep.subr.bf16.mxu0 0
    %138 = vmatpush1.bf16.msra.mxu0 0
    %139 = vmatprep.subr.bf16.mxu0 0
    %140 = vmatpush1.bf16.msra.mxu0 0
    %141 = vmatprep.subr.bf16.mxu0 0
    %142 = vmatpush1.bf16.msra.mxu0 0
    %143 = vmatprep.subr.bf16.mxu0 0
    %144 = vmatpush1.bf16.msra.mxu0 0
    %145 = vmatprep.subr.bf16.mxu0 0
    %146 = vmatpush1.bf16.msra.mxu0 0
    %147 = vmatprep.subr.bf16.mxu0 0
    %148 = vmatpush1.bf16.msra.mxu0 %v128
    %149 = vmatprep.subr.bf16.mxu0 0
    %150 = vmatpush1.bf16.msra.mxu0 %v127
    %151 = vmatprep.subr.bf16.mxu0 0
    %152 = vmatpush2.bf16.msra.mxu0 0
    %153 = vmatprep.subr.bf16.mxu0 0
    %154 = vmatpush2.bf16.msra.mxu0 0
    %155 = vmatprep.subr.bf16.mxu0 0
    %156 = vmatpush2.bf16.msra.mxu0 0
    %157 = vmatprep.subr.bf16.mxu0 0
    %158 = vmatpush2.bf16.msra.mxu0 0
    %159 = vmatprep.subr.bf16.mxu0 0
    %160 = vmatpush2.bf16.msra.mxu0 0
    %161 = vmatprep.subr.bf16.mxu0 0
    %162 = vmatpush2.bf16.msra.mxu0 0
    %163 = vmatprep.subr.bf16.mxu0 0
    %164 = vmatpush2.bf16.msra.mxu0 0
    %165 = vmatprep.subr.bf16.mxu0 0
    %166 = vmatpush2.bf16.msra.mxu0 0
    %167 = vmatprep.mubr.bf16.mxu0 0
    %168 = vmatmul.mubr.bf16.gmra.mxu0 %v133
    %v169 = vpop.f32.mrf.mxu0
    %v170 = vadd.f32 0.0, %v169
    %v171 = vpop.f32.mrf.mxu0
    %v172 = vpop.f32.mrf.mxu0
    %v173 = vpop.f32.mrf.mxu0
    %174 = vdwg.mxu0
    %v175 = vadd.f32 %v118, %v170
    %v176 = vmul.f32 %v175, 0.5
    %v177 = vsel %vm44, %v175, %v176
    %v178 = vtanh.pop %v177
    %v179 = vadd.f32 %v178, 1.0
    %v180 = vmul.f32 %v179, 0.5
    %v181 = vsel %vm44, %v178, %v180
    %v182 = vmul.f32 %v181, 0.0
    %184 = vrot.lane.b32.xlu0 %v181, 64
    %v185 = vpop.permute.xlu0 %184
    %v187 = vmul.f32 %v181, %v185
    %189 = vrot.lane.b32.xlu0 %v187, 32
    %v190 = vpop.permute.xlu0 %189
    %v192 = vadd.f32 %v182, %v190
    %v193 = vtanh.pop %v192
    %195 = vrot.lane.b32.xlu0 %v193, 64
    %v196 = vpop.permute.xlu0 %195
    %v198 = vmul.f32 %v181, %v196
    %v199 = vpack.c.bf16 %v198, %v198
    %v201 = vunpack.c.l.b16 %v199
    %v202 = vpack.c.b16 %v201, %v201
    %203 = vrot.lane.b32.xlu0 %v202, 32
    %v204 = vpop.permute.xlu0 %203
    %vm206 = vcmask 253952
    %207 = vst.msk [vmem:[#allocation3] sm:$0x1] %vm206, %v204
    %v208 = vld [vmem:[#allocation2 + $0x2] sm:$0x3]
    %209 = vrot.lane.b32.xlu0 %v199, 32
    %v210 = vpop.permute.xlu0 %209
    %v212 = vsel %vm131, %v210, 0
    %214 = vmatprep.subr.bf16.mxu0 0
    %215 = vmatpush1.bf16.msra.mxu0 0
    %216 = vmatprep.subr.bf16.mxu0 0
    %217 = vmatpush1.bf16.msra.mxu0 0
    %218 = vmatprep.subr.bf16.mxu0 0
    %219 = vmatpush1.bf16.msra.mxu0 0
    %220 = vmatprep.subr.bf16.mxu0 0
    %221 = vmatpush1.bf16.msra.mxu0 0
    %222 = vmatprep.subr.bf16.mxu0 0
    %223 = vmatpush1.bf16.msra.mxu0 0
    %224 = vmatprep.subr.bf16.mxu0 0
    %225 = vmatpush1.bf16.msra.mxu0 0
    %226 = vmatprep.subr.bf16.mxu0 0
    %227 = vmatpush1.bf16.msra.mxu0 %v128
    %228 = vmatprep.subr.bf16.mxu0 0
    %229 = vmatpush1.bf16.msra.mxu0 %v127
    %230 = vmatprep.subr.bf16.mxu0 0
    %231 = vmatpush2.bf16.msra.mxu0 0
    %232 = vmatprep.subr.bf16.mxu0 0
    %233 = vmatpush2.bf16.msra.mxu0 0
    %234 = vmatprep.subr.bf16.mxu0 0
    %235 = vmatpush2.bf16.msra.mxu0 0
    %236 = vmatprep.subr.bf16.mxu0 0
    %237 = vmatpush2.bf16.msra.mxu0 0
    %238 = vmatprep.subr.bf16.mxu0 0
    %239 = vmatpush2.bf16.msra.mxu0 0
    %240 = vmatprep.subr.bf16.mxu0 0
    %241 = vmatpush2.bf16.msra.mxu0 0
    %242 = vmatprep.subr.bf16.mxu0 0
    %243 = vmatpush2.bf16.msra.mxu0 0
    %244 = vmatprep.subr.bf16.mxu0 0
    %245 = vmatpush2.bf16.msra.mxu0 0
    %246 = vmatprep.mubr.bf16.mxu0 0
    %247 = vmatmul.mubr.bf16.gmra.mxu0 %v212
    %v248 = vpop.f32.mrf.mxu0
    %v249 = vadd.f32 0.0, %v248
    %v250 = vpop.f32.mrf.mxu0
    %v251 = vpop.f32.mrf.mxu0
    %v252 = vpop.f32.mrf.mxu0
    %253 = vdwg.mxu0
    %v254 = vadd.f32 %v208, %v249
    %v255 = vmul.f32 %v254, 0.5
    %v256 = vsel %vm44, %v254, %v255
    %v257 = vtanh.pop %v256
    %v258 = vadd.f32 %v257, 1.0
    %v259 = vmul.f32 %v258, 0.5
    %v260 = vsel %vm44, %v257, %v259
    %v261 = vmul.f32 %v260, %v192
    %263 = vrot.lane.b32.xlu0 %v260, 64
    %v264 = vpop.permute.xlu0 %263
    %v266 = vmul.f32 %v260, %v264
    %268 = vrot.lane.b32.xlu0 %v266, 32
    %v269 = vpop.permute.xlu0 %268
    %v271 = vadd.f32 %v261, %v269
    %v272 = vtanh.pop %v271
    %274 = vrot.lane.b32.xlu0 %v272, 64
    %v275 = vpop.permute.xlu0 %274
    %v277 = vmul.f32 %v260, %v275
    %v278 = vpack.c.bf16 %v277, %v277
    %v280 = vunpack.c.l.b16 %v278
    %v281 = vpack.c.b16 %v280, %v280
    %v282 = vrot.slane %v281, 7
    %283 = vrot.lane.b32.xlu0 %v282, 32
    %v284 = vpop.permute.xlu0 %283
    %vm286 = vcmask 254977
    %287 = vst.msk [vmem:[#allocation3] sm:$0x2] %vm286, %v284
    %v288 = vld [vmem:[#allocation2 + $0x4] sm:$0x3]
    %289 = vrot.lane.b32.xlu0 %v278, 32
    %v290 = vpop.permute.xlu0 %289
    %v292 = vsel %vm131, %v290, 0
    %294 = vmatprep.subr.bf16.mxu0 0
    %295 = vmatpush1.bf16.msra.mxu0 0
    %296 = vmatprep.subr.bf16.mxu0 0
    %297 = vmatpush1.bf16.msra.mxu0 0
    %298 = vmatprep.subr.bf16.mxu0 0
    %299 = vmatpush1.bf16.msra.mxu0 0
    %300 = vmatprep.subr.bf16.mxu0 0
    %301 = vmatpush1.bf16.msra.mxu0 0
    %302 = vmatprep.subr.bf16.mxu0 0
    %303 = vmatpush1.bf16.msra.mxu0 0
    %304 = vmatprep.subr.bf16.mxu0 0
    %305 = vmatpush1.bf16.msra.mxu0 0
    %306 = vmatprep.subr.bf16.mxu0 0
    %307 = vmatpush1.bf16.msra.mxu0 %v128
    %308 = vmatprep.subr.bf16.mxu0 0
    %309 = vmatpush1.bf16.msra.mxu0 %v127
    %310 = vmatprep.subr.bf16.mxu0 0
    %311 = vmatpush2.bf16.msra.mxu0 0
    %312 = vmatprep.subr.bf16.mxu0 0
    %313 = vmatpush2.bf16.msra.mxu0 0
    %314 = vmatprep.subr.bf16.mxu0 0
    %315 = vmatpush2.bf16.msra.mxu0 0
    %316 = vmatprep.subr.bf16.mxu0 0
    %317 = vmatpush2.bf16.msra.mxu0 0
    %318 = vmatprep.subr.bf16.mxu0 0
    %319 = vmatpush2.bf16.msra.mxu0 0
    %320 = vmatprep.subr.bf16.mxu0 0
    %321 = vmatpush2.bf16.msra.mxu0 0
    %322 = vmatprep.subr.bf16.mxu0 0
    %323 = vmatpush2.bf16.msra.mxu0 0
    %324 = vmatprep.subr.bf16.mxu0 0
    %325 = vmatpush2.bf16.msra.mxu0 0
    %326 = vmatprep.mubr.bf16.mxu0 0
    %327 = vmatmul.mubr.bf16.gmra.mxu0 %v292
    %v328 = vpop.f32.mrf.mxu0
    %v329 = vadd.f32 0.0, %v328
    %v330 = vpop.f32.mrf.mxu0
    %v331 = vpop.f32.mrf.mxu0
    %v332 = vpop.f32.mrf.mxu0
    %333 = vdwg.mxu0
    %v334 = vadd.f32 %v288, %v329
    %v335 = vmul.f32 %v334, 0.5
    %v336 = vsel %vm44, %v334, %v335
    %v337 = vtanh.pop %v336
    %v338 = vadd.f32 %v337, 1.0
    %v339 = vmul.f32 %v338, 0.5
    %v340 = vsel %vm44, %v337, %v339
    %v341 = vmul.f32 %v340, %v271
    %343 = vrot.lane.b32.xlu0 %v340, 64
    %v344 = vpop.permute.xlu0 %343
    %v346 = vmul.f32 %v340, %v344
    %348 = vrot.lane.b32.xlu0 %v346, 32
    %v349 = vpop.permute.xlu0 %348
    %v351 = vadd.f32 %v341, %v349
    %v352 = vtanh.pop %v351
    %354 = vrot.lane.b32.xlu0 %v352, 64
    %v355 = vpop.permute.xlu0 %354
    %v357 = vmul.f32 %v340, %v355
    %v358 = vpack.c.bf16 %v357, %v357
    %v360 = vunpack.c.l.b16 %v358
    %v361 = vpack.c.b16 %v360, %v360
    %v362 = vrot.slane %v361, 6
    %363 = vrot.lane.b32.xlu0 %v362, 32
    %v364 = vpop.permute.xlu0 %363
    %vm366 = vcmask 256002
    %367 = vst.msk [vmem:[#allocation3] sm:$0x4] %vm366, %v364
    %v368 = vld [vmem:[#allocation2 + $0x6] sm:$0x3]
    %369 = vrot.lane.b32.xlu0 %v358, 32
    %v370 = vpop.permute.xlu0 %369
    %v372 = vsel %vm131, %v370, 0
    %374 = vmatprep.subr.bf16.mxu0 0
    %375 = vmatpush1.bf16.msra.mxu0 0
    %376 = vmatprep.subr.bf16.mxu0 0
    %377 = vmatpush1.bf16.msra.mxu0 0
    %378 = vmatprep.subr.bf16.mxu0 0
    %379 = vmatpush1.bf16.msra.mxu0 0
    %380 = vmatprep.subr.bf16.mxu0 0
    %381 = vmatpush1.bf16.msra.mxu0 0
    %382 = vmatprep.subr.bf16.mxu0 0
    %383 = vmatpush1.bf16.msra.mxu0 0
    %384 = vmatprep.subr.bf16.mxu0 0
    %385 = vmatpush1.bf16.msra.mxu0 0
    %386 = vmatprep.subr.bf16.mxu0 0
    %387 = vmatpush1.bf16.msra.mxu0 %v128
    %388 = vmatprep.subr.bf16.mxu0 0
    %389 = vmatpush1.bf16.msra.mxu0 %v127
    %390 = vmatprep.subr.bf16.mxu0 0
    %391 = vmatpush2.bf16.msra.mxu0 0
    %392 = vmatprep.subr.bf16.mxu0 0
    %393 = vmatpush2.bf16.msra.mxu0 0
    %394 = vmatprep.subr.bf16.mxu0 0
    %395 = vmatpush2.bf16.msra.mxu0 0
    %396 = vmatprep.subr.bf16.mxu0 0
    %397 = vmatpush2.bf16.msra.mxu0 0
    %398 = vmatprep.subr.bf16.mxu0 0
    %399 = vmatpush2.bf16.msra.mxu0 0
    %400 = vmatprep.subr.bf16.mxu0 0
    %401 = vmatpush2.bf16.msra.mxu0 0
    %402 = vmatprep.subr.bf16.mxu0 0
    %403 = vmatpush2.bf16.msra.mxu0 0
    %404 = vmatprep.subr.bf16.mxu0 0
    %405 = vmatpush2.bf16.msra.mxu0 0
    %406 = vmatprep.mubr.bf16.mxu0 0
    %407 = vmatmul.mubr.bf16.gmra.mxu0 %v372
    %v408 = vpop.f32.mrf.mxu0
    %v409 = vadd.f32 0.0, %v408
    %v410 = vpop.f32.mrf.mxu0
    %v411 = vpop.f32.mrf.mxu0
    %v412 = vpop.f32.mrf.mxu0
    %413 = vdwg.mxu0
    %v414 = vadd.f32 %v368, %v409
    %v415 = vmul.f32 %v414, 0.5
    %v416 = vsel %vm44, %v414, %v415
    %v417 = vtanh.pop %v416
    %v418 = vadd.f32 %v417, 1.0
    %v419 = vmul.f32 %v418, 0.5
    %v420 = vsel %vm44, %v417, %v419
    %v421 = vmul.f32 %v420, %v351
    %423 = vrot.lane.b32.xlu0 %v420, 64
    %v424 = vpop.permute.xlu0 %423
    %v426 = vmul.f32 %v420, %v424
    %428 = vrot.lane.b32.xlu0 %v426, 32
    %v429 = vpop.permute.xlu0 %428
    %v431 = vadd.f32 %v421, %v429
    %v432 = vtanh.pop %v431
    %434 = vrot.lane.b32.xlu0 %v432, 64
    %v435 = vpop.permute.xlu0 %434
    %v437 = vmul.f32 %v420, %v435
    %v438 = vpack.c.bf16 %v437, %v437
    %v440 = vunpack.c.l.b16 %v438
    %v441 = vpack.c.b16 %v440, %v440
    %v442 = vrot.slane %v441, 5
    %443 = vrot.lane.b32.xlu0 %v442, 32
    %v444 = vpop.permute.xlu0 %443
    %vm446 = vcmask 257027
    %447 = vst.msk [vmem:[#allocation3] sm:$0x8] %vm446, %v444
    %v448 = vld [vmem:[#allocation2 + $0x8] sm:$0x3]
    %449 = vrot.lane.b32.xlu0 %v438, 32
    %v450 = vpop.permute.xlu0 %449
    %v452 = vsel %vm131, %v450, 0
    %454 = vmatprep.subr.bf16.mxu0 0
    %455 = vmatpush1.bf16.msra.mxu0 0
    %456 = vmatprep.subr.bf16.mxu0 0
    %457 = vmatpush1.bf16.msra.mxu0 0
    %458 = vmatprep.subr.bf16.mxu0 0
    %459 = vmatpush1.bf16.msra.mxu0 0
    %460 = vmatprep.subr.bf16.mxu0 0
    %461 = vmatpush1.bf16.msra.mxu0 0
    %462 = vmatprep.subr.bf16.mxu0 0
    %463 = vmatpush1.bf16.msra.mxu0 0
    %464 = vmatprep.subr.bf16.mxu0 0
    %465 = vmatpush1.bf16.msra.mxu0 0
    %466 = vmatprep.subr.bf16.mxu0 0
    %467 = vmatpush1.bf16.msra.mxu0 %v128
    %468 = vmatprep.subr.bf16.mxu0 0
    %469 = vmatpush1.bf16.msra.mxu0 %v127
    %470 = vmatprep.subr.bf16.mxu0 0
    %471 = vmatpush2.bf16.msra.mxu0 0
    %472 = vmatprep.subr.bf16.mxu0 0
    %473 = vmatpush2.bf16.msra.mxu0 0
    %474 = vmatprep.subr.bf16.mxu0 0
    %475 = vmatpush2.bf16.msra.mxu0 0
    %476 = vmatprep.subr.bf16.mxu0 0
    %477 = vmatpush2.bf16.msra.mxu0 0
    %478 = vmatprep.subr.bf16.mxu0 0
    %479 = vmatpush2.bf16.msra.mxu0 0
    %480 = vmatprep.subr.bf16.mxu0 0
    %481 = vmatpush2.bf16.msra.mxu0 0
    %482 = vmatprep.subr.bf16.mxu0 0
    %483 = vmatpush2.bf16.msra.mxu0 0
    %484 = vmatprep.subr.bf16.mxu0 0
    %485 = vmatpush2.bf16.msra.mxu0 0
    %486 = vmatprep.mubr.bf16.mxu0 0
    %487 = vmatmul.mubr.bf16.gmra.mxu0 %v452
    %v488 = vpop.f32.mrf.mxu0
    %v489 = vadd.f32 0.0, %v488
    %v490 = vpop.f32.mrf.mxu0
    %v491 = vpop.f32.mrf.mxu0
    %v492 = vpop.f32.mrf.mxu0
    %493 = vdwg.mxu0
    %v494 = vadd.f32 %v448, %v489
    %v495 = vmul.f32 %v494, 0.5
    %v496 = vsel %vm44, %v494, %v495
    %v497 = vtanh.pop %v496
    %v498 = vadd.f32 %v497, 1.0
    %v499 = vmul.f32 %v498, 0.5
    %v500 = vsel %vm44, %v497, %v499
    %v501 = vmul.f32 %v500, %v431
    %503 = vrot.lane.b32.xlu0 %v500, 64
    %v504 = vpop.permute.xlu0 %503
    %v506 = vmul.f32 %v500, %v504
    %508 = vrot.lane.b32.xlu0 %v506, 32
    %v509 = vpop.permute.xlu0 %508
    %v511 = vadd.f32 %v501, %v509
    %v512 = vtanh.pop %v511
    %514 = vrot.lane.b32.xlu0 %v512, 64
    %v515 = vpop.permute.xlu0 %514
    %v517 = vmul.f32 %v500, %v515
    %v518 = vpack.c.bf16 %v517, %v517
    %v520 = vunpack.c.l.b16 %v518
    %v521 = vpack.c.b16 %v520, %v520
    %522 = vrot.lane.b32.xlu0 %v521, 32
    %v523 = vpop.permute.xlu0 %522
    %525 = vst.msk [vmem:[#allocation3 + $0x4] sm:$0x1] %vm206, %v523
    %v526 = vld [vmem:[#allocation2 + $0xa] sm:$0x3]
    %527 = vrot.lane.b32.xlu0 %v518, 32
    %v528 = vpop.permute.xlu0 %527
    %v530 = vsel %vm131, %v528, 0
    %532 = vmatprep.subr.bf16.mxu0 0
    %533 = vmatpush1.bf16.msra.mxu0 0
    %534 = vmatprep.subr.bf16.mxu0 0
    %535 = vmatpush1.bf16.msra.mxu0 0
    %536 = vmatprep.subr.bf16.mxu0 0
    %537 = vmatpush1.bf16.msra.mxu0 0
    %538 = vmatprep.subr.bf16.mxu0 0
    %539 = vmatpush1.bf16.msra.mxu0 0
    %540 = vmatprep.subr.bf16.mxu0 0
    %541 = vmatpush1.bf16.msra.mxu0 0
    %542 = vmatprep.subr.bf16.mxu0 0
    %543 = vmatpush1.bf16.msra.mxu0 0
    %544 = vmatprep.subr.bf16.mxu0 0
    %545 = vmatpush1.bf16.msra.mxu0 %v128
    %546 = vmatprep.subr.bf16.mxu0 0
    %547 = vmatpush1.bf16.msra.mxu0 %v127
    %548 = vmatprep.subr.bf16.mxu0 0
    %549 = vmatpush2.bf16.msra.mxu0 0
    %550 = vmatprep.subr.bf16.mxu0 0
    %551 = vmatpush2.bf16.msra.mxu0 0
    %552 = vmatprep.subr.bf16.mxu0 0
    %553 = vmatpush2.bf16.msra.mxu0 0
    %554 = vmatprep.subr.bf16.mxu0 0
    %555 = vmatpush2.bf16.msra.mxu0 0
    %556 = vmatprep.subr.bf16.mxu0 0
    %557 = vmatpush2.bf16.msra.mxu0 0
    %558 = vmatprep.subr.bf16.mxu0 0
    %559 = vmatpush2.bf16.msra.mxu0 0
    %560 = vmatprep.subr.bf16.mxu0 0
    %561 = vmatpush2.bf16.msra.mxu0 0
    %562 = vmatprep.subr.bf16.mxu0 0
    %563 = vmatpush2.bf16.msra.mxu0 0
    %564 = vmatprep.mubr.bf16.mxu0 0
    %565 = vmatmul.mubr.bf16.gmra.mxu0 %v530
    %v566 = vpop.f32.mrf.mxu0
    %v567 = vadd.f32 0.0, %v566
    %v568 = vpop.f32.mrf.mxu0
    %v569 = vpop.f32.mrf.mxu0
    %v570 = vpop.f32.mrf.mxu0
    %571 = vdwg.mxu0
    %v572 = vadd.f32 %v526, %v567
    %v573 = vmul.f32 %v572, 0.5
    %v574 = vsel %vm44, %v572, %v573
    %v575 = vtanh.pop %v574
    %v576 = vadd.f32 %v575, 1.0
    %v577 = vmul.f32 %v576, 0.5
    %v578 = vsel %vm44, %v575, %v577
    %v579 = vmul.f32 %v578, %v511
    %581 = vrot.lane.b32.xlu0 %v578, 64
    %v582 = vpop.permute.xlu0 %581
    %v584 = vmul.f32 %v578, %v582
    %586 = vrot.lane.b32.xlu0 %v584, 32
    %v587 = vpop.permute.xlu0 %586
    %v589 = vadd.f32 %v579, %v587
    %v590 = vtanh.pop %v589
    %592 = vrot.lane.b32.xlu0 %v590, 64
    %v593 = vpop.permute.xlu0 %592
    %v595 = vmul.f32 %v578, %v593
    %v596 = vpack.c.bf16 %v595, %v595
    %v598 = vunpack.c.l.b16 %v596
    %v599 = vpack.c.b16 %v598, %v598
    %v600 = vrot.slane %v599, 7
    %601 = vrot.lane.b32.xlu0 %v600, 32
    %v602 = vpop.permute.xlu0 %601
    %604 = vst.msk [vmem:[#allocation3 + $0x4] sm:$0x2] %vm286, %v602
    %v605 = vld [vmem:[#allocation2 + $0xc] sm:$0x3]
    %606 = vrot.lane.b32.xlu0 %v596, 32
    %v607 = vpop.permute.xlu0 %606
    %v609 = vsel %vm131, %v607, 0
    %611 = vmatprep.subr.bf16.mxu0 0
    %612 = vmatpush1.bf16.msra.mxu0 0
    %613 = vmatprep.subr.bf16.mxu0 0
    %614 = vmatpush1.bf16.msra.mxu0 0
    %615 = vmatprep.subr.bf16.mxu0 0
    %616 = vmatpush1.bf16.msra.mxu0 0
    %617 = vmatprep.subr.bf16.mxu0 0
    %618 = vmatpush1.bf16.msra.mxu0 0
    %619 = vmatprep.subr.bf16.mxu0 0
    %620 = vmatpush1.bf16.msra.mxu0 0
    %621 = vmatprep.subr.bf16.mxu0 0
    %622 = vmatpush1.bf16.msra.mxu0 0
    %623 = vmatprep.subr.bf16.mxu0 0
    %624 = vmatpush1.bf16.msra.mxu0 %v128
    %625 = vmatprep.subr.bf16.mxu0 0
    %626 = vmatpush1.bf16.msra.mxu0 %v127
    %627 = vmatprep.subr.bf16.mxu0 0
    %628 = vmatpush2.bf16.msra.mxu0 0
    %629 = vmatprep.subr.bf16.mxu0 0
    %630 = vmatpush2.bf16.msra.mxu0 0
    %631 = vmatprep.subr.bf16.mxu0 0
    %632 = vmatpush2.bf16.msra.mxu0 0
    %633 = vmatprep.subr.bf16.mxu0 0
    %634 = vmatpush2.bf16.msra.mxu0 0
    %635 = vmatprep.subr.bf16.mxu0 0
    %636 = vmatpush2.bf16.msra.mxu0 0
    %637 = vmatprep.subr.bf16.mxu0 0
    %638 = vmatpush2.bf16.msra.mxu0 0
    %639 = vmatprep.subr.bf16.mxu0 0
    %640 = vmatpush2.bf16.msra.mxu0 0
    %641 = vmatprep.subr.bf16.mxu0 0
    %642 = vmatpush2.bf16.msra.mxu0 0
    %643 = vmatprep.mubr.bf16.mxu0 0
    %644 = vmatmul.mubr.bf16.gmra.mxu0 %v609
    %v645 = vpop.f32.mrf.mxu0
    %v646 = vadd.f32 0.0, %v645
    %v647 = vpop.f32.mrf.mxu0
    %v648 = vpop.f32.mrf.mxu0
    %v649 = vpop.f32.mrf.mxu0
    %650 = vdwg.mxu0
    %v651 = vadd.f32 %v605, %v646
    %v652 = vmul.f32 %v651, 0.5
    %v653 = vsel %vm44, %v651, %v652
    %v654 = vtanh.pop %v653
    %v655 = vadd.f32 %v654, 1.0
    %v656 = vmul.f32 %v655, 0.5
    %v657 = vsel %vm44, %v654, %v656
    %v658 = vmul.f32 %v657, %v589
    %660 = vrot.lane.b32.xlu0 %v657, 64
    %v661 = vpop.permute.xlu0 %660
    %v663 = vmul.f32 %v657, %v661
    %665 = vrot.lane.b32.xlu0 %v663, 32
    %v666 = vpop.permute.xlu0 %665
    %v668 = vadd.f32 %v658, %v666
    %v669 = vtanh.pop %v668
    %671 = vrot.lane.b32.xlu0 %v669, 64
    %v672 = vpop.permute.xlu0 %671
    %v674 = vmul.f32 %v657, %v672
    %v675 = vpack.c.bf16 %v674, %v674
    %v677 = vunpack.c.l.b16 %v675
    %v678 = vpack.c.b16 %v677, %v677
    %v679 = vrot.slane %v678, 6
    %680 = vrot.lane.b32.xlu0 %v679, 32
    %v681 = vpop.permute.xlu0 %680
    %683 = vst.msk [vmem:[#allocation3 + $0x4] sm:$0x4] %vm366, %v681
    %v684 = vld [vmem:[#allocation2 + $0xe] sm:$0x3]
    %685 = vrot.lane.b32.xlu0 %v675, 32
    %v686 = vpop.permute.xlu0 %685
    %v688 = vsel %vm131, %v686, 0
    %690 = vmatprep.subr.bf16.mxu0 0
    %691 = vmatpush1.bf16.msra.mxu0 0
    %692 = vmatprep.subr.bf16.mxu0 0
    %693 = vmatpush1.bf16.msra.mxu0 0
    %694 = vmatprep.subr.bf16.mxu0 0
    %695 = vmatpush1.bf16.msra.mxu0 0
    %696 = vmatprep.subr.bf16.mxu0 0
    %697 = vmatpush1.bf16.msra.mxu0 0
    %698 = vmatprep.subr.bf16.mxu0 0
    %699 = vmatpush1.bf16.msra.mxu0 0
    %700 = vmatprep.subr.bf16.mxu0 0
    %701 = vmatpush1.bf16.msra.mxu0 0
    %702 = vmatprep.subr.bf16.mxu0 0
    %703 = vmatpush1.bf16.msra.mxu0 %v128
    %704 = vmatprep.subr.bf16.mxu0 0
    %705 = vmatpush1.bf16.msra.mxu0 %v127
    %706 = vmatprep.subr.bf16.mxu0 0
    %707 = vmatpush2.bf16.msra.mxu0 0
    %708 = vmatprep.subr.bf16.mxu0 0
    %709 = vmatpush2.bf16.msra.mxu0 0
    %710 = vmatprep.subr.bf16.mxu0 0
    %711 = vmatpush2.bf16.msra.mxu0 0
    %712 = vmatprep.subr.bf16.mxu0 0
    %713 = vmatpush2.bf16.msra.mxu0 0
    %714 = vmatprep.subr.bf16.mxu0 0
    %715 = vmatpush2.bf16.msra.mxu0 0
    %716 = vmatprep.subr.bf16.mxu0 0
    %717 = vmatpush2.bf16.msra.mxu0 0
    %718 = vmatprep.subr.bf16.mxu0 0
    %719 = vmatpush2.bf16.msra.mxu0 0
    %720 = vmatprep.subr.bf16.mxu0 0
    %721 = vmatpush2.bf16.msra.mxu0 0
    %722 = vmatprep.mubr.bf16.mxu0 0
    %723 = vmatmul.mubr.bf16.gmra.mxu0 %v688
    %v724 = vpop.f32.mrf.mxu0
    %v725 = vadd.f32 0.0, %v724
    %v726 = vpop.f32.mrf.mxu0
    %v727 = vpop.f32.mrf.mxu0
    %v728 = vpop.f32.mrf.mxu0
    %729 = vdwg.mxu0
    %v730 = vadd.f32 %v684, %v725
    %v731 = vmul.f32 %v730, 0.5
    %v732 = vsel %vm44, %v730, %v731
    %v733 = vtanh.pop %v732
    %v734 = vadd.f32 %v733, 1.0
    %v735 = vmul.f32 %v734, 0.5
    %v736 = vsel %vm44, %v733, %v735
    %v737 = vmul.f32 %v736, %v668
    %739 = vrot.lane.b32.xlu0 %v736, 64
    %v740 = vpop.permute.xlu0 %739
    %v742 = vmul.f32 %v736, %v740
    %744 = vrot.lane.b32.xlu0 %v742, 32
    %v745 = vpop.permute.xlu0 %744
    %v747 = vadd.f32 %v737, %v745
    %v748 = vtanh.pop %v747
    %750 = vrot.lane.b32.xlu0 %v748, 64
    %v751 = vpop.permute.xlu0 %750
    %v753 = vmul.f32 %v736, %v751
    %v754 = vpack.c.bf16 %v753, %v753
    %v756 = vunpack.c.l.b16 %v754
    %v757 = vpack.c.b16 %v756, %v756
    %v758 = vrot.slane %v757, 5
    %759 = vrot.lane.b32.xlu0 %v758, 32
    %v760 = vpop.permute.xlu0 %759
    %762 = vst.msk [vmem:[#allocation3 + $0x4] sm:$0x8] %vm446, %v760
    %v763 = vld [vmem:[#allocation3] sm:$0xf]
    %v764 = vld [vmem:[#allocation3 + $0x4] sm:$0xf]
    %v765 = vld [vmem:[%s4] sm:$0xf]
    %v766 = vld [vmem:[%s4 + $0x4] sm:$0xf]
    %v767 = vld [vmem:[%s4 + $0x8] sm:$0xf]
    %v768 = vld [vmem:[%s4 + $0xc] sm:$0xf]
    %v769 = vld [vmem:[%s6] sm:$0x1]
    %v771 = vlaneseq
    %v772 = vshrl.u32 %v771, 7
    %v773 = vsub.s32 0, %v772
    %v774 = vrot.slane %v769, %v773
    %v778 = vunpack.c.l.b16 %v763
    %v779 = vunpack.c.l.b16 %v764
    %v780 = vpack.c.b16 %v779, %v778
    %v785 = vunpack.c.l.b16 %v765
    %v786 = vunpack.c.l.b16 %v766
    %v787 = vunpack.c.l.b16 %v767
    %v788 = vunpack.c.l.b16 %v768
    %v789 = vpack.c.b16 %v786, %v785
    %v790 = vpack.c.b16 %v788, %v787
    %v794 = vsel %vm131, %v780, 0
    %796 = vmatprep.subr.bf16.mxu0 0
    %797 = vmatpush1.bf16.msra.mxu0 0
    %798 = vmatprep.subr.bf16.mxu0 0
    %799 = vmatpush1.bf16.msra.mxu0 0
    %800 = vmatprep.subr.bf16.mxu0 0
    %801 = vmatpush1.bf16.msra.mxu0 0
    %802 = vmatprep.subr.bf16.mxu0 0
    %803 = vmatpush1.bf16.msra.mxu0 0
    %804 = vmatprep.subr.bf16.mxu0 0
    %805 = vmatpush1.bf16.msra.mxu0 0
    %806 = vmatprep.subr.bf16.mxu0 0
    %807 = vmatpush1.bf16.msra.mxu0 0
    %808 = vmatprep.subr.bf16.mxu0 0
    %809 = vmatpush1.bf16.msra.mxu0 %v790
    %810 = vmatprep.subr.bf16.mxu0 0
    %811 = vmatpush1.bf16.msra.mxu0 %v789
    %812 = vmatprep.subr.bf16.mxu0 0
    %813 = vmatpush2.bf16.msra.mxu0 0
    %814 = vmatprep.subr.bf16.mxu0 0
    %815 = vmatpush2.bf16.msra.mxu0 0
    %816 = vmatprep.subr.bf16.mxu0 0
    %817 = vmatpush2.bf16.msra.mxu0 0
    %818 = vmatprep.subr.bf16.mxu0 0
    %819 = vmatpush2.bf16.msra.mxu0 0
    %820 = vmatprep.subr.bf16.mxu0 0
    %821 = vmatpush2.bf16.msra.mxu0 0
    %822 = vmatprep.subr.bf16.mxu0 0
    %823 = vmatpush2.bf16.msra.mxu0 0
    %824 = vmatprep.subr.bf16.mxu0 0
    %825 = vmatpush2.bf16.msra.mxu0 0
    %826 = vmatprep.subr.bf16.mxu0 0
    %827 = vmatpush2.bf16.msra.mxu0 0
    %828 = vmatprep.mubr.bf16.mxu0 0
    %829 = vmatmul.mubr.bf16.gmra.mxu0 %v794
    %v830 = vpop.f32.mrf.mxu0
    %v831 = vadd.f32 %v774, %v830
    %v832 = vpop.f32.mrf.mxu0
    %v833 = vpop.f32.mrf.mxu0
    %v834 = vadd.f32 %v774, %v833
    %v835 = vpop.f32.mrf.mxu0
    %836 = vdwg.mxu0
    %837 = vst [vmem:[#allocation2] sm:$0xff] %v831
    %838 = vst [vmem:[#allocation2 + $0x8] sm:$0xff] %v834
    %v839 = vld [vmem:[%s5] sm:$0xf]
    %v840 = vld [vmem:[%s5 + $0x4] sm:$0xf]
    %v841 = vld [vmem:[%s5 + $0x8] sm:$0xf]
    %v842 = vld [vmem:[%s5 + $0xc] sm:$0xf]
    %v843 = vld [vmem:[#allocation2] sm:$0x3]
    %v848 = vunpack.c.l.b16 %v839
    %v849 = vunpack.c.l.b16 %v840
    %v850 = vunpack.c.l.b16 %v841
    %v851 = vunpack.c.l.b16 %v842
    %v852 = vpack.c.b16 %v849, %v848
    %v853 = vpack.c.b16 %v851, %v850
    %856 = vmatprep.subr.bf16.mxu0 0
    %857 = vmatpush1.bf16.msra.mxu0 0
    %858 = vmatprep.subr.bf16.mxu0 0
    %859 = vmatpush1.bf16.msra.mxu0 0
    %860 = vmatprep.subr.bf16.mxu0 0
    %861 = vmatpush1.bf16.msra.mxu0 0
    %862 = vmatprep.subr.bf16.mxu0 0
    %863 = vmatpush1.bf16.msra.mxu0 0
    %864 = vmatprep.subr.bf16.mxu0 0
    %865 = vmatpush1.bf16.msra.mxu0 0
    %866 = vmatprep.subr.bf16.mxu0 0
    %867 = vmatpush1.bf16.msra.mxu0 0
    %868 = vmatprep.subr.bf16.mxu0 0
    %869 = vmatpush1.bf16.msra.mxu0 %v853
    %870 = vmatprep.subr.bf16.mxu0 0
    %871 = vmatpush1.bf16.msra.mxu0 %v852
    %872 = vmatprep.subr.bf16.mxu0 0
    %873 = vmatpush2.bf16.msra.mxu0 0
    %874 = vmatprep.subr.bf16.mxu0 0
    %875 = vmatpush2.bf16.msra.mxu0 0
    %876 = vmatprep.subr.bf16.mxu0 0
    %877 = vmatpush2.bf16.msra.mxu0 0
    %878 = vmatprep.subr.bf16.mxu0 0
    %879 = vmatpush2.bf16.msra.mxu0 0
    %880 = vmatprep.subr.bf16.mxu0 0
    %881 = vmatpush2.bf16.msra.mxu0 0
    %882 = vmatprep.subr.bf16.mxu0 0
    %883 = vmatpush2.bf16.msra.mxu0 0
    %884 = vmatprep.subr.bf16.mxu0 0
    %885 = vmatpush2.bf16.msra.mxu0 0
    %886 = vmatprep.subr.bf16.mxu0 0
    %887 = vmatpush2.bf16.msra.mxu0 0
    %888 = vmatprep.mubr.bf16.mxu0 0
    %889 = vmatmul.mubr.bf16.gmra.mxu0 %v133
    %v890 = vpop.f32.mrf.mxu0
    %v891 = vadd.f32 0.0, %v890
    %v892 = vpop.f32.mrf.mxu0
    %v893 = vpop.f32.mrf.mxu0
    %v894 = vpop.f32.mrf.mxu0
    %895 = vdwg.mxu0
    %v896 = vadd.f32 %v843, %v891
    %v897 = vmul.f32 %v896, 0.5
    %v898 = vsel %vm44, %v896, %v897
    %v899 = vtanh.pop %v898
    %v900 = vadd.f32 %v899, 1.0
    %v901 = vmul.f32 %v900, 0.5
    %v902 = vsel %vm44, %v899, %v901
    %v903 = vmul.f32 %v902, 0.0
    %905 = vrot.lane.b32.xlu0 %v902, 64
    %v906 = vpop.permute.xlu0 %905
    %v908 = vmul.f32 %v902, %v906
    %910 = vrot.lane.b32.xlu0 %v908, 32
    %v911 = vpop.permute.xlu0 %910
    %v913 = vadd.f32 %v903, %v911
    %v914 = vtanh.pop %v913
    %916 = vrot.lane.b32.xlu0 %v914, 64
    %v917 = vpop.permute.xlu0 %916
    %v919 = vmul.f32 %v902, %v917
    %v920 = vld [vmem:[#allocation2 + $0x2] sm:$0x3]
    %v921 = vpack.c.bf16 %v919, %v919
    %923 = vrot.lane.b32.xlu0 %v921, 32
    %v924 = vpop.permute.xlu0 %923
    %v926 = vsel %vm131, %v924, 0
    %928 = vmatprep.subr.bf16.mxu0 0
    %929 = vmatpush1.bf16.msra.mxu0 0
    %930 = vmatprep.subr.bf16.mxu0 0
    %931 = vmatpush1.bf16.msra.mxu0 0
    %932 = vmatprep.subr.bf16.mxu0 0
    %933 = vmatpush1.bf16.msra.mxu0 0
    %934 = vmatprep.subr.bf16.mxu0 0
    %935 = vmatpush1.bf16.msra.mxu0 0
    %936 = vmatprep.subr.bf16.mxu0 0
    %937 = vmatpush1.bf16.msra.mxu0 0
    %938 = vmatprep.subr.bf16.mxu0 0
    %939 = vmatpush1.bf16.msra.mxu0 0
    %940 = vmatprep.subr.bf16.mxu0 0
    %941 = vmatpush1.bf16.msra.mxu0 %v853
    %942 = vmatprep.subr.bf16.mxu0 0
    %943 = vmatpush1.bf16.msra.mxu0 %v852
    %944 = vmatprep.subr.bf16.mxu0 0
    %945 = vmatpush2.bf16.msra.mxu0 0
    %946 = vmatprep.subr.bf16.mxu0 0
    %947 = vmatpush2.bf16.msra.mxu0 0
    %948 = vmatprep.subr.bf16.mxu0 0
    %949 = vmatpush2.bf16.msra.mxu0 0
    %950 = vmatprep.subr.bf16.mxu0 0
    %951 = vmatpush2.bf16.msra.mxu0 0
    %952 = vmatprep.subr.bf16.mxu0 0
    %953 = vmatpush2.bf16.msra.mxu0 0
    %954 = vmatprep.subr.bf16.mxu0 0
    %955 = vmatpush2.bf16.msra.mxu0 0
    %956 = vmatprep.subr.bf16.mxu0 0
    %957 = vmatpush2.bf16.msra.mxu0 0
    %958 = vmatprep.subr.bf16.mxu0 0
    %959 = vmatpush2.bf16.msra.mxu0 0
    %960 = vmatprep.mubr.bf16.mxu0 0
    %961 = vmatmul.mubr.bf16.gmra.mxu0 %v926
    %v962 = vpop.f32.mrf.mxu0
    %v963 = vadd.f32 0.0, %v962
    %v964 = vpop.f32.mrf.mxu0
    %v965 = vpop.f32.mrf.mxu0
    %v966 = vpop.f32.mrf.mxu0
    %967 = vdwg.mxu0
    %v968 = vadd.f32 %v920, %v963
    %v969 = vmul.f32 %v968, 0.5
    %v970 = vsel %vm44, %v968, %v969
    %v971 = vtanh.pop %v970
    %v972 = vadd.f32 %v971, 1.0
    %v973 = vmul.f32 %v972, 0.5
    %v974 = vsel %vm44, %v971, %v973
    %v975 = vmul.f32 %v974, %v913
    %977 = vrot.lane.b32.xlu0 %v974, 64
    %v978 = vpop.permute.xlu0 %977
    %v980 = vmul.f32 %v974, %v978
    %982 = vrot.lane.b32.xlu0 %v980, 32
    %v983 = vpop.permute.xlu0 %982
    %v985 = vadd.f32 %v975, %v983
    %v986 = vtanh.pop %v985
    %988 = vrot.lane.b32.xlu0 %v986, 64
    %v989 = vpop.permute.xlu0 %988
    %v991 = vmul.f32 %v974, %v989
    %v992 = vld [vmem:[#allocation2 + $0x4] sm:$0x3]
    %v993 = vpack.c.bf16 %v991, %v991
    %995 = vrot.lane.b32.xlu0 %v993, 32
    %v996 = vpop.permute.xlu0 %995
    %v998 = vsel %vm131, %v996, 0
    %1000 = vmatprep.subr.bf16.mxu0 0
    %1001 = vmatpush1.bf16.msra.mxu0 0
    %1002 = vmatprep.subr.bf16.mxu0 0
    %1003 = vmatpush1.bf16.msra.mxu0 0
    %1004 = vmatprep.subr.bf16.mxu0 0
    %1005 = vmatpush1.bf16.msra.mxu0 0
    %1006 = vmatprep.subr.bf16.mxu0 0
    %1007 = vmatpush1.bf16.msra.mxu0 0
    %1008 = vmatprep.subr.bf16.mxu0 0
    %1009 = vmatpush1.bf16.msra.mxu0 0
    %1010 = vmatprep.subr.bf16.mxu0 0
    %1011 = vmatpush1.bf16.msra.mxu0 0
    %1012 = vmatprep.subr.bf16.mxu0 0
    %1013 = vmatpush1.bf16.msra.mxu0 %v853
    %1014 = vmatprep.subr.bf16.mxu0 0
    %1015 = vmatpush1.bf16.msra.mxu0 %v852
    %1016 = vmatprep.subr.bf16.mxu0 0
    %1017 = vmatpush2.bf16.msra.mxu0 0
    %1018 = vmatprep.subr.bf16.mxu0 0
    %1019 = vmatpush2.bf16.msra.mxu0 0
    %1020 = vmatprep.subr.bf16.mxu0 0
    %1021 = vmatpush2.bf16.msra.mxu0 0
    %1022 = vmatprep.subr.bf16.mxu0 0
    %1023 = vmatpush2.bf16.msra.mxu0 0
    %1024 = vmatprep.subr.bf16.mxu0 0
    %1025 = vmatpush2.bf16.msra.mxu0 0
    %1026 = vmatprep.subr.bf16.mxu0 0
    %1027 = vmatpush2.bf16.msra.mxu0 0
    %1028 = vmatprep.subr.bf16.mxu0 0
    %1029 = vmatpush2.bf16.msra.mxu0 0
    %1030 = vmatprep.subr.bf16.mxu0 0
    %1031 = vmatpush2.bf16.msra.mxu0 0
    %1032 = vmatprep.mubr.bf16.mxu0 0
    %1033 = vmatmul.mubr.bf16.gmra.mxu0 %v998
    %v1034 = vpop.f32.mrf.mxu0
    %v1035 = vadd.f32 0.0, %v1034
    %v1036 = vpop.f32.mrf.mxu0
    %v1037 = vpop.f32.mrf.mxu0
    %v1038 = vpop.f32.mrf.mxu0
    %1039 = vdwg.mxu0
    %v1040 = vadd.f32 %v992, %v1035
    %v1041 = vmul.f32 %v1040, 0.5
    %v1042 = vsel %vm44, %v1040, %v1041
    %v1043 = vtanh.pop %v1042
    %v1044 = vadd.f32 %v1043, 1.0
    %v1045 = vmul.f32 %v1044, 0.5
    %v1046 = vsel %vm44, %v1043, %v1045
    %v1047 = vmul.f32 %v1046, %v985
    %1049 = vrot.lane.b32.xlu0 %v1046, 64
    %v1050 = vpop.permute.xlu0 %1049
    %v1052 = vmul.f32 %v1046, %v1050
    %1054 = vrot.lane.b32.xlu0 %v1052, 32
    %v1055 = vpop.permute.xlu0 %1054
    %v1057 = vadd.f32 %v1047, %v1055
    %v1058 = vtanh.pop %v1057
    %1060 = vrot.lane.b32.xlu0 %v1058, 64
    %v1061 = vpop.permute.xlu0 %1060
    %v1063 = vmul.f32 %v1046, %v1061
    %v1064 = vld [vmem:[#allocation2 + $0x6] sm:$0x3]
    %v1065 = vpack.c.bf16 %v1063, %v1063
    %1067 = vrot.lane.b32.xlu0 %v1065, 32
    %v1068 = vpop.permute.xlu0 %1067
    %v1070 = vsel %vm131, %v1068, 0
    %1072 = vmatprep.subr.bf16.mxu0 0
    %1073 = vmatpush1.bf16.msra.mxu0 0
    %1074 = vmatprep.subr.bf16.mxu0 0
    %1075 = vmatpush1.bf16.msra.mxu0 0
    %1076 = vmatprep.subr.bf16.mxu0 0
    %1077 = vmatpush1.bf16.msra.mxu0 0
    %1078 = vmatprep.subr.bf16.mxu0 0
    %1079 = vmatpush1.bf16.msra.mxu0 0
    %1080 = vmatprep.subr.bf16.mxu0 0
    %1081 = vmatpush1.bf16.msra.mxu0 0
    %1082 = vmatprep.subr.bf16.mxu0 0
    %1083 = vmatpush1.bf16.msra.mxu0 0
    %1084 = vmatprep.subr.bf16.mxu0 0
    %1085 = vmatpush1.bf16.msra.mxu0 %v853
    %1086 = vmatprep.subr.bf16.mxu0 0
    %1087 = vmatpush1.bf16.msra.mxu0 %v852
    %1088 = vmatprep.subr.bf16.mxu0 0
    %1089 = vmatpush2.bf16.msra.mxu0 0
    %1090 = vmatprep.subr.bf16.mxu0 0
    %1091 = vmatpush2.bf16.msra.mxu0 0
    %1092 = vmatprep.subr.bf16.mxu0 0
    %1093 = vmatpush2.bf16.msra.mxu0 0
    %1094 = vmatprep.subr.bf16.mxu0 0
    %1095 = vmatpush2.bf16.msra.mxu0 0
    %1096 = vmatprep.subr.bf16.mxu0 0
    %1097 = vmatpush2.bf16.msra.mxu0 0
    %1098 = vmatprep.subr.bf16.mxu0 0
    %1099 = vmatpush2.bf16.msra.mxu0 0
    %1100 = vmatprep.subr.bf16.mxu0 0
    %1101 = vmatpush2.bf16.msra.mxu0 0
    %1102 = vmatprep.subr.bf16.mxu0 0
    %1103 = vmatpush2.bf16.msra.mxu0 0
    %1104 = vmatprep.mubr.bf16.mxu0 0
    %1105 = vmatmul.mubr.bf16.gmra.mxu0 %v1070
    %v1106 = vpop.f32.mrf.mxu0
    %v1107 = vadd.f32 0.0, %v1106
    %v1108 = vpop.f32.mrf.mxu0
    %v1109 = vpop.f32.mrf.mxu0
    %v1110 = vpop.f32.mrf.mxu0
    %1111 = vdwg.mxu0
    %v1112 = vadd.f32 %v1064, %v1107
    %v1113 = vmul.f32 %v1112, 0.5
    %v1114 = vsel %vm44, %v1112, %v1113
    %v1115 = vtanh.pop %v1114
    %v1116 = vadd.f32 %v1115, 1.0
    %v1117 = vmul.f32 %v1116, 0.5
    %v1118 = vsel %vm44, %v1115, %v1117
    %v1119 = vmul.f32 %v1118, %v1057
    %1121 = vrot.lane.b32.xlu0 %v1118, 64
    %v1122 = vpop.permute.xlu0 %1121
    %v1124 = vmul.f32 %v1118, %v1122
    %1126 = vrot.lane.b32.xlu0 %v1124, 32
    %v1127 = vpop.permute.xlu0 %1126
    %v1129 = vadd.f32 %v1119, %v1127
    %v1130 = vtanh.pop %v1129
    %1132 = vrot.lane.b32.xlu0 %v1130, 64
    %v1133 = vpop.permute.xlu0 %1132
    %v1135 = vmul.f32 %v1118, %v1133
    %v1136 = vld [vmem:[#allocation2 + $0x8] sm:$0x3]
    %v1137 = vpack.c.bf16 %v1135, %v1135
    %1139 = vrot.lane.b32.xlu0 %v1137, 32
    %v1140 = vpop.permute.xlu0 %1139
    %v1142 = vsel %vm131, %v1140, 0
    %1144 = vmatprep.subr.bf16.mxu0 0
    %1145 = vmatpush1.bf16.msra.mxu0 0
    %1146 = vmatprep.subr.bf16.mxu0 0
    %1147 = vmatpush1.bf16.msra.mxu0 0
    %1148 = vmatprep.subr.bf16.mxu0 0
    %1149 = vmatpush1.bf16.msra.mxu0 0
    %1150 = vmatprep.subr.bf16.mxu0 0
    %1151 = vmatpush1.bf16.msra.mxu0 0
    %1152 = vmatprep.subr.bf16.mxu0 0
    %1153 = vmatpush1.bf16.msra.mxu0 0
    %1154 = vmatprep.subr.bf16.mxu0 0
    %1155 = vmatpush1.bf16.msra.mxu0 0
    %1156 = vmatprep.subr.bf16.mxu0 0
    %1157 = vmatpush1.bf16.msra.mxu0 %v853
    %1158 = vmatprep.subr.bf16.mxu0 0
    %1159 = vmatpush1.bf16.msra.mxu0 %v852
    %1160 = vmatprep.subr.bf16.mxu0 0
    %1161 = vmatpush2.bf16.msra.mxu0 0
    %1162 = vmatprep.subr.bf16.mxu0 0
    %1163 = vmatpush2.bf16.msra.mxu0 0
    %1164 = vmatprep.subr.bf16.mxu0 0
    %1165 = vmatpush2.bf16.msra.mxu0 0
    %1166 = vmatprep.subr.bf16.mxu0 0
    %1167 = vmatpush2.bf16.msra.mxu0 0
    %1168 = vmatprep.subr.bf16.mxu0 0
    %1169 = vmatpush2.bf16.msra.mxu0 0
    %1170 = vmatprep.subr.bf16.mxu0 0
    %1171 = vmatpush2.bf16.msra.mxu0 0
    %1172 = vmatprep.subr.bf16.mxu0 0
    %1173 = vmatpush2.bf16.msra.mxu0 0
    %1174 = vmatprep.subr.bf16.mxu0 0
    %1175 = vmatpush2.bf16.msra.mxu0 0
    %1176 = vmatprep.mubr.bf16.mxu0 0
    %1177 = vmatmul.mubr.bf16.gmra.mxu0 %v1142
    %v1178 = vpop.f32.mrf.mxu0
    %v1179 = vadd.f32 0.0, %v1178
    %v1180 = vpop.f32.mrf.mxu0
    %v1181 = vpop.f32.mrf.mxu0
    %v1182 = vpop.f32.mrf.mxu0
    %1183 = vdwg.mxu0
    %v1184 = vadd.f32 %v1136, %v1179
    %v1185 = vmul.f32 %v1184, 0.5
    %v1186 = vsel %vm44, %v1184, %v1185
    %v1187 = vtanh.pop %v1186
    %v1188 = vadd.f32 %v1187, 1.0
    %v1189 = vmul.f32 %v1188, 0.5
    %v1190 = vsel %vm44, %v1187, %v1189
    %v1191 = vmul.f32 %v1190, %v1129
    %1193 = vrot.lane.b32.xlu0 %v1190, 64
    %v1194 = vpop.permute.xlu0 %1193
    %v1196 = vmul.f32 %v1190, %v1194
    %1198 = vrot.lane.b32.xlu0 %v1196, 32
    %v1199 = vpop.permute.xlu0 %1198
    %v1201 = vadd.f32 %v1191, %v1199
    %v1202 = vtanh.pop %v1201
    %1204 = vrot.lane.b32.xlu0 %v1202, 64
    %v1205 = vpop.permute.xlu0 %1204
    %v1207 = vmul.f32 %v1190, %v1205
    %v1208 = vld [vmem:[#allocation2 + $0xa] sm:$0x3]
    %v1209 = vpack.c.bf16 %v1207, %v1207
    %1211 = vrot.lane.b32.xlu0 %v1209, 32
    %v1212 = vpop.permute.xlu0 %1211
    %v1214 = vsel %vm131, %v1212, 0
    %1216 = vmatprep.subr.bf16.mxu0 0
    %1217 = vmatpush1.bf16.msra.mxu0 0
    %1218 = vmatprep.subr.bf16.mxu0 0
    %1219 = vmatpush1.bf16.msra.mxu0 0
    %1220 = vmatprep.subr.bf16.mxu0 0
    %1221 = vmatpush1.bf16.msra.mxu0 0
    %1222 = vmatprep.subr.bf16.mxu0 0
    %1223 = vmatpush1.bf16.msra.mxu0 0
    %1224 = vmatprep.subr.bf16.mxu0 0
    %1225 = vmatpush1.bf16.msra.mxu0 0
    %1226 = vmatprep.subr.bf16.mxu0 0
    %1227 = vmatpush1.bf16.msra.mxu0 0
    %1228 = vmatprep.subr.bf16.mxu0 0
    %1229 = vmatpush1.bf16.msra.mxu0 %v853
    %1230 = vmatprep.subr.bf16.mxu0 0
    %1231 = vmatpush1.bf16.msra.mxu0 %v852
    %1232 = vmatprep.subr.bf16.mxu0 0
    %1233 = vmatpush2.bf16.msra.mxu0 0
    %1234 = vmatprep.subr.bf16.mxu0 0
    %1235 = vmatpush2.bf16.msra.mxu0 0
    %1236 = vmatprep.subr.bf16.mxu0 0
    %1237 = vmatpush2.bf16.msra.mxu0 0
    %1238 = vmatprep.subr.bf16.mxu0 0
    %1239 = vmatpush2.bf16.msra.mxu0 0
    %1240 = vmatprep.subr.bf16.mxu0 0
    %1241 = vmatpush2.bf16.msra.mxu0 0
    %1242 = vmatprep.subr.bf16.mxu0 0
    %1243 = vmatpush2.bf16.msra.mxu0 0
    %1244 = vmatprep.subr.bf16.mxu0 0
    %1245 = vmatpush2.bf16.msra.mxu0 0
    %1246 = vmatprep.subr.bf16.mxu0 0
    %1247 = vmatpush2.bf16.msra.mxu0 0
    %1248 = vmatprep.mubr.bf16.mxu0 0
    %1249 = vmatmul.mubr.bf16.gmra.mxu0 %v1214
    %v1250 = vpop.f32.mrf.mxu0
    %v1251 = vadd.f32 0.0, %v1250
    %v1252 = vpop.f32.mrf.mxu0
    %v1253 = vpop.f32.mrf.mxu0
    %v1254 = vpop.f32.mrf.mxu0
    %1255 = vdwg.mxu0
    %v1256 = vadd.f32 %v1208, %v1251
    %v1257 = vmul.f32 %v1256, 0.5
    %v1258 = vsel %vm44, %v1256, %v1257
    %v1259 = vtanh.pop %v1258
    %v1260 = vadd.f32 %v1259, 1.0
    %v1261 = vmul.f32 %v1260, 0.5
    %v1262 = vsel %vm44, %v1259, %v1261
    %v1263 = vmul.f32 %v1262, %v1201
    %1265 = vrot.lane.b32.xlu0 %v1262, 64
    %v1266 = vpop.permute.xlu0 %1265
    %v1268 = vmul.f32 %v1262, %v1266
    %1270 = vrot.lane.b32.xlu0 %v1268, 32
    %v1271 = vpop.permute.xlu0 %1270
    %v1273 = vadd.f32 %v1263, %v1271
    %v1274 = vtanh.pop %v1273
    %1276 = vrot.lane.b32.xlu0 %v1274, 64
    %v1277 = vpop.permute.xlu0 %1276
    %v1279 = vmul.f32 %v1262, %v1277
    %v1280 = vld [vmem:[#allocation2 + $0xc] sm:$0x3]
    %v1281 = vpack.c.bf16 %v1279, %v1279
    %1283 = vrot.lane.b32.xlu0 %v1281, 32
    %v1284 = vpop.permute.xlu0 %1283
    %v1286 = vsel %vm131, %v1284, 0
    %1288 = vmatprep.subr.bf16.mxu0 0
    %1289 = vmatpush1.bf16.msra.mxu0 0
    %1290 = vmatprep.subr.bf16.mxu0 0
    %1291 = vmatpush1.bf16.msra.mxu0 0
    %1292 = vmatprep.subr.bf16.mxu0 0
    %1293 = vmatpush1.bf16.msra.mxu0 0
    %1294 = vmatprep.subr.bf16.mxu0 0
    %1295 = vmatpush1.bf16.msra.mxu0 0
    %1296 = vmatprep.subr.bf16.mxu0 0
    %1297 = vmatpush1.bf16.msra.mxu0 0
    %1298 = vmatprep.subr.bf16.mxu0 0
    %1299 = vmatpush1.bf16.msra.mxu0 0
    %1300 = vmatprep.subr.bf16.mxu0 0
    %1301 = vmatpush1.bf16.msra.mxu0 %v853
    %1302 = vmatprep.subr.bf16.mxu0 0
    %1303 = vmatpush1.bf16.msra.mxu0 %v852
    %1304 = vmatprep.subr.bf16.mxu0 0
    %1305 = vmatpush2.bf16.msra.mxu0 0
    %1306 = vmatprep.subr.bf16.mxu0 0
    %1307 = vmatpush2.bf16.msra.mxu0 0
    %1308 = vmatprep.subr.bf16.mxu0 0
    %1309 = vmatpush2.bf16.msra.mxu0 0
    %1310 = vmatprep.subr.bf16.mxu0 0
    %1311 = vmatpush2.bf16.msra.mxu0 0
    %1312 = vmatprep.subr.bf16.mxu0 0
    %1313 = vmatpush2.bf16.msra.mxu0 0
    %1314 = vmatprep.subr.bf16.mxu0 0
    %1315 = vmatpush2.bf16.msra.mxu0 0
    %1316 = vmatprep.subr.bf16.mxu0 0
    %1317 = vmatpush2.bf16.msra.mxu0 0
    %1318 = vmatprep.subr.bf16.mxu0 0
    %1319 = vmatpush2.bf16.msra.mxu0 0
    %1320 = vmatprep.mubr.bf16.mxu0 0
    %1321 = vmatmul.mubr.bf16.gmra.mxu0 %v1286
    %v1322 = vpop.f32.mrf.mxu0
    %v1323 = vadd.f32 0.0, %v1322
    %v1324 = vpop.f32.mrf.mxu0
    %v1325 = vpop.f32.mrf.mxu0
    %v1326 = vpop.f32.mrf.mxu0
    %1327 = vdwg.mxu0
    %v1328 = vadd.f32 %v1280, %v1323
    %v1329 = vmul.f32 %v1328, 0.5
    %v1330 = vsel %vm44, %v1328, %v1329
    %v1331 = vtanh.pop %v1330
    %v1332 = vadd.f32 %v1331, 1.0
    %v1333 = vmul.f32 %v1332, 0.5
    %v1334 = vsel %vm44, %v1331, %v1333
    %v1335 = vmul.f32 %v1334, %v1273
    %1337 = vrot.lane.b32.xlu0 %v1334, 64
    %v1338 = vpop.permute.xlu0 %1337
    %v1340 = vmul.f32 %v1334, %v1338
    %1342 = vrot.lane.b32.xlu0 %v1340, 32
    %v1343 = vpop.permute.xlu0 %1342
    %v1345 = vadd.f32 %v1335, %v1343
    %v1346 = vtanh.pop %v1345
    %1348 = vrot.lane.b32.xlu0 %v1346, 64
    %v1349 = vpop.permute.xlu0 %1348
    %v1351 = vmul.f32 %v1334, %v1349
    %v1352 = vld [vmem:[#allocation2 + $0xe] sm:$0x3]
    %v1353 = vpack.c.bf16 %v1351, %v1351
    %1355 = vrot.lane.b32.xlu0 %v1353, 32
    %v1356 = vpop.permute.xlu0 %1355
    %v1358 = vsel %vm131, %v1356, 0
    %1360 = vmatprep.subr.bf16.mxu0 0
    %1361 = vmatpush1.bf16.msra.mxu0 0
    %1362 = vmatprep.subr.bf16.mxu0 0
    %1363 = vmatpush1.bf16.msra.mxu0 0
    %1364 = vmatprep.subr.bf16.mxu0 0
    %1365 = vmatpush1.bf16.msra.mxu0 0
    %1366 = vmatprep.subr.bf16.mxu0 0
    %1367 = vmatpush1.bf16.msra.mxu0 0
    %1368 = vmatprep.subr.bf16.mxu0 0
    %1369 = vmatpush1.bf16.msra.mxu0 0
    %1370 = vmatprep.subr.bf16.mxu0 0
    %1371 = vmatpush1.bf16.msra.mxu0 0
    %1372 = vmatprep.subr.bf16.mxu0 0
    %1373 = vmatpush1.bf16.msra.mxu0 %v853
    %1374 = vmatprep.subr.bf16.mxu0 0
    %1375 = vmatpush1.bf16.msra.mxu0 %v852
    %1376 = vmatprep.subr.bf16.mxu0 0
    %1377 = vmatpush2.bf16.msra.mxu0 0
    %1378 = vmatprep.subr.bf16.mxu0 0
    %1379 = vmatpush2.bf16.msra.mxu0 0
    %1380 = vmatprep.subr.bf16.mxu0 0
    %1381 = vmatpush2.bf16.msra.mxu0 0
    %1382 = vmatprep.subr.bf16.mxu0 0
    %1383 = vmatpush2.bf16.msra.mxu0 0
    %1384 = vmatprep.subr.bf16.mxu0 0
    %1385 = vmatpush2.bf16.msra.mxu0 0
    %1386 = vmatprep.subr.bf16.mxu0 0
    %1387 = vmatpush2.bf16.msra.mxu0 0
    %1388 = vmatprep.subr.bf16.mxu0 0
    %1389 = vmatpush2.bf16.msra.mxu0 0
    %1390 = vmatprep.subr.bf16.mxu0 0
    %1391 = vmatpush2.bf16.msra.mxu0 0
    %1392 = vmatprep.mubr.bf16.mxu0 0
    %1393 = vmatmul.mubr.bf16.gmra.mxu0 %v1358
    %v1394 = vpop.f32.mrf.mxu0
    %v1395 = vadd.f32 0.0, %v1394
    %v1396 = vpop.f32.mrf.mxu0
    %v1397 = vpop.f32.mrf.mxu0
    %v1398 = vpop.f32.mrf.mxu0
    %1399 = vdwg.mxu0
    %v1400 = vadd.f32 %v1352, %v1395
    %v1401 = vmul.f32 %v1400, 0.5
    %v1402 = vsel %vm44, %v1400, %v1401
    %v1403 = vtanh.pop %v1402
    %v1404 = vadd.f32 %v1403, 1.0
    %v1405 = vmul.f32 %v1404, 0.5
    %v1406 = vsel %vm44, %v1403, %v1405
    %v1407 = vmul.f32 %v1406, %v1345
    %1409 = vrot.lane.b32.xlu0 %v1406, 64
    %v1410 = vpop.permute.xlu0 %1409
    %v1412 = vmul.f32 %v1406, %v1410
    %1414 = vrot.lane.b32.xlu0 %v1412, 32
    %v1415 = vpop.permute.xlu0 %1414
    %v1417 = vadd.f32 %v1407, %v1415
    %v1418 = vtanh.pop %v1417
    %1420 = vrot.lane.b32.xlu0 %v1418, 64
    %v1421 = vpop.permute.xlu0 %1420
    %v1423 = vmul.f32 %v1406, %v1421
    %vm1424 = vcmask 1042176
    %v1425 = vsel %vm1424, %v1423, 0.0
    %v1426 = vrot.slane %v1425, 4
    %v1427 = vadd.f32 %v1425, %v1426
    %v1428 = vrot.slane %v1427, 2
    %v1429 = vadd.f32 %v1427, %v1428
    %v1430 = vrot.slane %v1429, 1
    %v1431 = vadd.f32 %v1429, %v1430
    %v1432 = vrcp.pop 2.0
    %v1433 = vmul.f32 %v1431, %v1432
    %v1434 = vsub.f32 %v1423, %v1433
    %v1435 = vmul.f32 %v1434, %v1434
    %v1436 = vsel %vm1424, %v1435, 0.0
    %v1437 = vrot.slane %v1436, 4
    %v1438 = vadd.f32 %v1436, %v1437
    %v1439 = vrot.slane %v1438, 2
    %v1440 = vadd.f32 %v1438, %v1439
    %v1441 = vrot.slane %v1440, 1
    %v1442 = vadd.f32 %v1440, %v1441
    %v1443 = vmul.f32 %v1442, %v1432
    %v1444 = vadd.f32 %v1443, 1e-05
    %v1445 = vrsqrt.pop %v1444
    %v1446 = vmul.f32 %v1434, %v1445
    %v1447 = vld [vmem:[%s7] sm:$0x1]
    %v1449 = vlaneseq
    %v1450 = vshrl.u32 %v1449, 7
    %v1451 = vsub.s32 0, %v1450
    %v1452 = vrot.slane %v1447, %v1451
    %1453 = vrot.lane.b32.xlu0 %v1452, 96
    %v1454 = vpop.permute.xlu0 %1453
    %v1456 = vmul.f32 %v1446, %v1454
    %v1457 = vld [vmem:[%s8] sm:$0x1]
    %v1459 = vlaneseq
    %v1460 = vshrl.u32 %v1459, 7
    %v1461 = vsub.s32 0, %v1460
    %v1462 = vrot.slane %v1457, %v1461
    %1463 = vrot.lane.b32.xlu0 %v1462, 96
    %v1464 = vpop.permute.xlu0 %1463
    %v1466 = vadd.f32 %v1456, %v1464
    %v1467 = vld [vmem:[%s9] sm:$0xff]
    %v1468 = vld [vmem:[%s9 + $0x8] sm:$0xff]
    %v1469 = vld [vmem:[%s9 + $0x10] sm:$0xff]
    %v1470 = vld [vmem:[%s9 + $0x18] sm:$0xff]
    %v1471 = vld [vmem:[%s10] sm:$0x1]
    %v1473 = vlaneseq
    %v1474 = vshrl.u32 %v1473, 7
    %v1475 = vsub.s32 0, %v1474
    %v1476 = vrot.slane %v1471, %v1475
    %1479 = vrot.lane.b32.xlu0 %v1466, 32
    %v1480 = vpop.permute.xlu0 %1479
    %v1481 = vsel %vm131, %v1480, 0
    %1483 = vmatprep.subr.mxu0 0.0
    %1484 = vmatpush1.msra.mxu0 0.0
    %1485 = vmatprep.subr.mxu0 0.0
    %1486 = vmatpush1.msra.mxu0 0.0
    %1487 = vmatprep.subr.mxu0 0.0
    %1488 = vmatpush1.msra.mxu0 0.0
    %1489 = vmatprep.subr.mxu0 0.0
    %1490 = vmatpush1.msra.mxu0 0.0
    %1491 = vmatprep.subr.mxu0 0.0
    %1492 = vmatpush1.msra.mxu0 0.0
    %1493 = vmatprep.subr.mxu0 0.0
    %1494 = vmatpush1.msra.mxu0 0.0
    %1495 = vmatprep.subr.mxu0 0.0
    %1496 = vmatpush1.msra.mxu0 0.0
    %1497 = vmatprep.subr.mxu0 0.0
    %1498 = vmatpush1.msra.mxu0 0.0
    %1499 = vmatprep.subr.mxu0 0.0
    %1500 = vmatpush1.msra.mxu0 0.0
    %1501 = vmatprep.subr.mxu0 0.0
    %1502 = vmatpush1.msra.mxu0 0.0
    %1503 = vmatprep.subr.mxu0 0.0
    %1504 = vmatpush1.msra.mxu0 0.0
    %1505 = vmatprep.subr.mxu0 0.0
    %1506 = vmatpush1.msra.mxu0 0.0
    %1507 = vmatprep.subr.mxu0 0.0
    %1508 = vmatpush1.msra.mxu0 %v1470
    %1509 = vmatprep.subr.mxu0 0.0
    %1510 = vmatpush1.msra.mxu0 %v1469
    %1511 = vmatprep.subr.mxu0 0.0
    %1512 = vmatpush1.msra.mxu0 %v1468
    %1513 = vmatprep.subr.mxu0 0.0
    %1514 = vmatpush1.msra.mxu0 %v1467
    %1515 = vmatprep.subr.mxu0 0.0
    %1516 = vmatpush2.msra.mxu0 0.0
    %1517 = vmatprep.subr.mxu0 0.0
    %1518 = vmatpush2.msra.mxu0 0.0
    %1519 = vmatprep.subr.mxu0 0.0
    %1520 = vmatpush2.msra.mxu0 0.0
    %1521 = vmatprep.subr.mxu0 0.0
    %1522 = vmatpush2.msra.mxu0 0.0
    %1523 = vmatprep.subr.mxu0 0.0
    %1524 = vmatpush2.msra.mxu0 0.0
    %1525 = vmatprep.subr.mxu0 0.0
    %1526 = vmatpush2.msra.mxu0 0.0
    %1527 = vmatprep.subr.mxu0 0.0
    %1528 = vmatpush2.msra.mxu0 0.0
    %1529 = vmatprep.subr.mxu0 0.0
    %1530 = vmatpush2.msra.mxu0 0.0
    %1531 = vmatprep.subr.mxu0 0.0
    %1532 = vmatpush2.msra.mxu0 0.0
    %1533 = vmatprep.subr.mxu0 0.0
    %1534 = vmatpush2.msra.mxu0 0.0
    %1535 = vmatprep.subr.mxu0 0.0
    %1536 = vmatpush2.msra.mxu0 0.0
    %1537 = vmatprep.subr.mxu0 0.0
    %1538 = vmatpush2.msra.mxu0 0.0
    %1539 = vmatprep.subr.mxu0 0.0
    %1540 = vmatpush2.msra.mxu0 0.0
    %1541 = vmatprep.subr.mxu0 0.0
    %1542 = vmatpush2.msra.mxu0 0.0
    %1543 = vmatprep.subr.mxu0 0.0
    %1544 = vmatpush2.msra.mxu0 0.0
    %1545 = vmatprep.subr.mxu0 0.0
    %1546 = vmatpush2.msra.mxu0 0.0
    %1547 = vmatprep.mubr.f32.mxu0 0.0
    %1548 = vmatmul.mubr.f32.gmra.mxu0 %v1481
    %v1549 = vpop.f32.mrf.mxu0
    %v1550 = vadd.f32 %v1476, %v1549
    %v1551 = vpop.f32.mrf.mxu0
    %1552 = vdwg.mxu0
    %vm1553 = vcmask 25600
    %1554 = vst.msk [vmem:[#allocation4] sm:$0x3] %vm1553, %v1550
    // Predicated region
    $region46: #{lstm_model_forward.1} parent=1 // pred_check
      _
    $region47: #{lstm_model_forward.1} parent=1 // pred_check_branch
      %1556 = sbr.rel (0) target = $region49
    $region48: #{lstm_model_forward.1} parent=1 // pred_region
      %s1558 = ssub.s32 32, 32
      %1559 = vsyncadd [#allocation5], %s1558
      %s1561 = sshll.u32 [#allocation4], 4
      %s1562 = int_to_ptr.vmem [resolvable:$true] %s1561
      %1564 = dma.vmem_to_hbm [thread:$0]  %s1562, 32, %s11, [#allocation5]
    $region49: #{lstm_model_forward.1} parent=1 // pred_fallthru
      _
    // Predicated region
    $region50: #{lstm_model_forward.1} parent=1 // pred_check
      _
    $region51: #{lstm_model_forward.1} parent=1 // pred_check_branch
      %1566 = sbr.rel (0) target = $region53
    $region52: #{lstm_model_forward.1} parent=1 // pred_region
      %1567 = dma.done [#allocation5], 32
    $region53: #{lstm_model_forward.1} parent=1 // pred_fallthru
      _
    %1568 = vsyncpa [#allocation5], 1

</llo_original>
